<compile_context>
chip_gen: v5e
topology: v5e:2x2
jax: 0.10.0
libtpu: 0.0.40
codegen_flags: <defaults>
</compile_context>

<pallas_src>
import functools
import math

import jax
import jax.numpy as jnp
from jax.experimental import pallas as pl
from jax.experimental.pallas import tpu as pltpu


# ---------------------------------------------------------------------------
# Kernel
# ---------------------------------------------------------------------------

def _layernorm(x, gamma, beta, eps=1e-5):
    # One-pass variance (E[x^2] - mean^2) in f32; clamp tiny negative cancellation.
    mu = jnp.mean(x, axis=-1, keepdims=True)
    ex2 = jnp.mean(x * x, axis=-1, keepdims=True)
    var = jnp.maximum(ex2 - mu * mu, 0.0)
    return (x - mu) * jax.lax.rsqrt(var + eps) * gamma + beta


def fused_audio_kernel(a_ref, w_in_ref, b_in_ref, pos_ref,
                       wqkv_ref, bqkv_ref, wo_ref, w1_ref, b1_ref, w2_ref,
                       vec_ref, o_ref, *, n_heads, hid_scale):
    layer = pl.program_id(1)
    bt, S, A = a_ref.shape
    H = o_ref.shape[2]
    nh = n_heads
    hd = H // nh
    M = bt * S
    bf = jnp.bfloat16
    inv_attn_scale = 1.0 / math.sqrt(hd)

    # ---- input projection + positional encoding (first layer step only) ----
    @pl.when(layer == 0)
    def _():
        a2 = a_ref[...].reshape(M, A).astype(bf)
        y = jnp.dot(a2, w_in_ref[...], preferred_element_type=jnp.float32)
        y = (y + b_in_ref[...]) * hid_scale
        o_ref[...] = y.reshape(bt, S, H) + pos_ref[...][None, :, :]

    # Activation is VMEM-resident in the output block across the layer axis.
    x = o_ref[...].reshape(M, H)                                        # (Bt*S, H) f32

    # ---- fused Q/K/V projection: one lane-dense matmul ----
    qkv = jnp.dot(x.astype(bf), wqkv_ref[0],
                  preferred_element_type=jnp.float32) + bqkv_ref[0]     # (M, 3H) f32

    def split_heads(base):
        # head-major lane slices -> (nh, M, hd) -> fold batch into the leading
        # group axis (pure major-dim reshape) -> (nh*Bt, S, hd)
        parts = [qkv[:, base + h * hd: base + (h + 1) * hd] for h in range(nh)]
        return jnp.stack(parts, axis=0).reshape(nh * bt, S, hd)

    q = split_heads(0)
    k = split_heads(H)
    v = split_heads(2 * H)

    # ---- scaled dot-product attention, batched over (head, batch-row) ----
    s = jnp.einsum('gqd,gkd->gqk', q.astype(bf), k.astype(bf),
                   preferred_element_type=jnp.float32) * inv_attn_scale
    s = s - jnp.max(s, axis=-1, keepdims=True)
    p = jnp.exp(s)
    p = p * pl.reciprocal(jnp.sum(p, axis=-1, keepdims=True), approx=True)
    ctx = jnp.einsum('gqk,gkd->gqd', p.astype(bf), v.astype(bf),
                     preferred_element_type=jnp.float32)                # (nh*Bt, S, hd)

    # Concatenate heads back to (M, H), then ONE full-K output projection.
    ctx3 = ctx.reshape(nh, M, hd)
    ctx_cat = jnp.concatenate([ctx3[h] for h in range(nh)], axis=-1)    # (M, H)

    vec = vec_ref[0]                  # (6, H): bo, b2, ln1_g, ln1_b, ln2_g, ln2_b
    bo, b2 = vec[0:1], vec[1:2]
    g1, be1 = vec[2:3], vec[3:4]
    g2, be2 = vec[4:5], vec[5:6]

    attn = jnp.dot(ctx_cat.astype(bf), wo_ref[0],
                   preferred_element_type=jnp.float32) + bo
    x1 = _layernorm(x + attn, g1, be1)

    # ---- position-wise feed forward ----
    h1 = jnp.dot(x1.astype(bf), w1_ref[0],
                 preferred_element_type=jnp.float32) + b1_ref[0]
    h1 = jnp.maximum(h1, 0.0)
    ff = jnp.dot(h1.astype(bf), w2_ref[0],
                 preferred_element_type=jnp.float32) + b2

    o_ref[...] = _layernorm(x1 + ff, g2, be2).reshape(bt, S, H)


# ---------------------------------------------------------------------------
# Wrapper
# ---------------------------------------------------------------------------

def _pick_batch_tile(B, cap=8):
    for bt in range(min(B, cap), 0, -1):
        if B % bt == 0:
            return bt
    return 1


def _vmem_limit_bytes(Bt, S, A, H, P, n_heads):
    f32, bf16 = 4, 2
    per_layer = (4 * H * H + 2 * H * P) * bf16 + (9 * H + P) * f32      # weights + vecs
    consts = A * H * bf16 + (S * H + H) * f32                           # w_in, pos, b_in
    io_blocks = Bt * S * (A + H) * f32                                  # audio + out block
    live = Bt * S * (3 * H + 4 * H + P) * f32 + 2 * n_heads * Bt * S * S * f32
    est = 2 * (per_layer + io_blocks) + consts + live                   # double-buffered
    # Headroom, but capped at 32 MiB so the same config fits v7x's per-TC VMEM.
    return int(min(max(4 * est, 16 * 2 ** 20), 32 * 2 ** 20))


def audio_representations(audio, p, hid_dim, n_heads):
    """audio: [B, S, audio_split_samples] f32 -> [B, S, hid_dim] f32."""
    B, S, A = audio.shape
    H = hid_dim
    L = p["wqkv"].shape[0]
    P = p["w1"].shape[2]
    Bt = _pick_batch_tile(B)
    hid_scale = float(math.sqrt(H))

    def const(shape):
        return pl.BlockSpec(shape, lambda b, l, _n=len(shape): (0,) * _n)

    def per_layer(shape):
        return pl.BlockSpec((1,) + shape, lambda b, l, _n=len(shape): (l,) + (0,) * _n)

    in_specs = [
        pl.BlockSpec((Bt, S, A), lambda b, l: (b, 0, 0)),   # audio (reused across l)
        const((A, H)), const((1, H)), const((S, H)),        # w_in, b_in, pos
        per_layer((H, 3 * H)), per_layer((1, 3 * H)),       # fused wqkv, bqkv
        per_layer((H, H)),                                  # wo
        per_layer((H, P)), per_layer((1, P)),               # w1, b1
        per_layer((P, H)),                                  # w2
        per_layer((6, H)),                                  # packed bo,b2,ln1_g/b,ln2_g/b
    ]
    args = (audio, p["w_in"], p["b_in"], p["pos"],
            p["wqkv"], p["bqkv"], p["wo"], p["w1"], p["b1"], p["w2"], p["vec"])

    return pl.pallas_call(
        functools.partial(fused_audio_kernel, n_heads=n_heads, hid_scale=hid_scale),
        out_shape=jax.ShapeDtypeStruct((B, S, H), jnp.float32),
        grid=(B // Bt, L),
        in_specs=in_specs,
        out_specs=pl.BlockSpec((Bt, S, H), lambda b, l: (b, 0, 0)),
        compiler_params=pltpu.CompilerParams(
            dimension_semantics=("parallel", "arbitrary"),
            vmem_limit_bytes=_vmem_limit_bytes(Bt, S, A, H, P, n_heads),
        ),
    )(*args)


# ---------------------------------------------------------------------------
# Parameters (PyTorch layout) + packing into the kernel layout
# ---------------------------------------------------------------------------

def make_positional_encoding(max_len, hid_dim):
    pos = jnp.arange(max_len, dtype=jnp.float32)[:, None]
    div_term = jnp.exp(-jnp.arange(0, hid_dim, 2, dtype=jnp.float32)
                       * (math.log(10000.0) / hid_dim))
    pe = jnp.zeros((max_len, hid_dim), dtype=jnp.float32)
    pe = pe.at[:, 0::2].set(jnp.sin(pos * div_term))
    pe = pe.at[:, 1::2].set(jnp.cos(pos * div_term))
    return pe


def init_params(key, audio_split_samples, hid_dim, pf_dim, n_layers, seq_len):
    def linear(k, fan_in, fan_out):
        kw, kb = jax.random.split(k)
        w = jax.random.normal(kw, (fan_in, fan_out), jnp.float32) * 0.02
        b = jax.random.normal(kb, (1, fan_out), jnp.float32) * 0.02
        return w, b

    keys = jax.random.split(key, 1 + n_layers)
    w_in, b_in = linear(keys[0], audio_split_samples, hid_dim)
    layers = []
    for li in range(n_layers):
        lk = jax.random.split(keys[1 + li], 6)
        wq, bq = linear(lk[0], hid_dim, hid_dim)
        wk, bk = linear(lk[1], hid_dim, hid_dim)
        wv, bv = linear(lk[2], hid_dim, hid_dim)
        wo, bo = linear(lk[3], hid_dim, hid_dim)
        w1, b1 = linear(lk[4], hid_dim, pf_dim)
        w2, b2 = linear(lk[5], pf_dim, hid_dim)
        layers.append(dict(
            wq=wq, bq=bq, wk=wk, bk=bk, wv=wv, bv=bv, wo=wo, bo=bo,
            ln1_g=jnp.ones((1, hid_dim), jnp.float32),
            ln1_b=jnp.zeros((1, hid_dim), jnp.float32),
            w1=w1, b1=b1, w2=w2, b2=b2,
            ln2_g=jnp.ones((1, hid_dim), jnp.float32),
            ln2_b=jnp.zeros((1, hid_dim), jnp.float32),
        ))
    pos = make_positional_encoding(seq_len, hid_dim)
    return dict(w_in=w_in, b_in=b_in, pos=pos, layers=layers)


def pack_params(params, seq_len):
    """Stack per-layer params along a leading L axis, fuse Q/K/V weights into one
    lane-dense (L,H,3H) matrix (head-major columns), pack the small per-layer vectors,
    cast matmul weights to bf16 (pure JAX, done once)."""
    layers = params["layers"]
    bf = jnp.bfloat16

    def stack(name):
        return jnp.stack([lp[name] for lp in layers], axis=0)

    wqkv = jnp.concatenate([stack("wq"), stack("wk"), stack("wv")], axis=2)  # (L,H,3H)
    bqkv = jnp.concatenate([stack("bq"), stack("bk"), stack("bv")], axis=2)  # (L,1,3H)
    vec = jnp.concatenate([stack("bo"), stack("b2"),
                           stack("ln1_g"), stack("ln1_b"),
                           stack("ln2_g"), stack("ln2_b")], axis=1)          # (L,6,H)
    return dict(
        w_in=params["w_in"].astype(bf),
        b_in=params["b_in"],
        pos=params["pos"][:seq_len],
        wqkv=wqkv.astype(bf),
        bqkv=bqkv,
        wo=stack("wo").astype(bf),
        w1=stack("w1").astype(bf),
        b1=stack("b1"),
        w2=stack("w2").astype(bf),
        vec=vec,
    )


# ---------------------------------------------------------------------------
# Pure-JAX reference (mirrors the PyTorch forward; same bf16-at-dot policy)
# ---------------------------------------------------------------------------

def reference_forward(audio, params, hid_dim, n_heads):
    H = hid_dim
    nh = n_heads
    hd = H // nh
    bf = jnp.bfloat16

    def lin(x, w, b):
        return jnp.dot(x.astype(bf), w.astype(bf),
                       preferred_element_type=jnp.float32) + b

    B, S, _ = audio.shape
    x = lin(audio, params["w_in"], params["b_in"]) * math.sqrt(H)
    x = x + params["pos"][None, :S]
    for lp in params["layers"]:
        q = lin(x, lp["wq"], lp["bq"]).reshape(B, S, nh, hd).transpose(0, 2, 1, 3)
        k = lin(x, lp["wk"], lp["bk"]).reshape(B, S, nh, hd).transpose(0, 2, 1, 3)
        v = lin(x, lp["wv"], lp["bv"]).reshape(B, S, nh, hd).transpose(0, 2, 1, 3)
        s = jnp.einsum('bhqd,bhkd->bhqk', q.astype(bf), k.astype(bf),
                       preferred_element_type=jnp.float32) / math.sqrt(hd)
        p = jax.nn.softmax(s, axis=-1)
        ctx = jnp.einsum('bhqk,bhkd->bhqd', p.astype(bf), v.astype(bf),
                         preferred_element_type=jnp.float32)
        ctx = ctx.transpose(0, 2, 1, 3).reshape(B, S, H)
        attn = lin(ctx, lp["wo"], lp["bo"])
        x1 = _layernorm(x + attn, lp["ln1_g"], lp["ln1_b"])
        h1 = jnp.maximum(lin(x1, lp["w1"], lp["b1"]), 0.0)
        ff = lin(h1, lp["w2"], lp["b2"])
        x = _layernorm(x1 + ff, lp["ln2_g"], lp["ln2_b"])
    return x


# ---------------------------------------------------------------------------
# Main
# ---------------------------------------------------------------------------

if __name__ == "__main__":
    B, S = 2, 8                      # batch, number of audio chunks
    AUDIO_SPLIT_SAMPLES = 64         # samples per chunk (Linear fan-in)
    HID_DIM = 32
    N_HEADS = 4
    PF_DIM = 64
    N_LAYERS = 2

    key = jax.random.PRNGKey(0)
    k_data, k_params = jax.random.split(key)

    # Module expects [batch, max_audio_len] split into [B, S, audio_split_samples];
    # we feed it pre-split (the .squeeze() in forward is a no-op here).
    audio = jax.random.normal(k_data, (B, S, AUDIO_SPLIT_SAMPLES), jnp.float32)

    params = init_params(k_params, AUDIO_SPLIT_SAMPLES, HID_DIM, PF_DIM, N_LAYERS, S)
    packed = pack_params(params, S)

    out = audio_representations(audio, packed, HID_DIM, N_HEADS)
    out = jax.block_until_ready(out)

    assert out.shape == (B, S, HID_DIM), out.shape
    assert bool(jnp.all(jnp.isfinite(out)))

    ref = reference_forward(audio, params, HID_DIM, N_HEADS)
    max_err = float(jnp.max(jnp.abs(out - ref)))
    assert max_err < 5e-2, f"max abs err {max_err}"

    print("KERNEL_OK")
</pallas_src>

<mosaic_0001>
module attributes {stable_mosaic.version = 11 : i64} {
  func.func @fused_audio_kernel(%arg0: i32, %arg1: i32, %arg2: memref<2x8x64xf32, #tpu.memory_space<vmem>>, %arg3: memref<64x32xbf16, #tpu.memory_space<vmem>>, %arg4: memref<1x32xf32, #tpu.memory_space<vmem>>, %arg5: memref<8x32xf32, #tpu.memory_space<vmem>>, %arg6: memref<1x32x96xbf16, #tpu.memory_space<vmem>>, %arg7: memref<1x1x96xf32, #tpu.memory_space<vmem>>, %arg8: memref<1x32x32xbf16, #tpu.memory_space<vmem>>, %arg9: memref<1x32x64xbf16, #tpu.memory_space<vmem>>, %arg10: memref<1x1x64xf32, #tpu.memory_space<vmem>>, %arg11: memref<1x64x32xbf16, #tpu.memory_space<vmem>>, %arg12: memref<1x6x32xf32, #tpu.memory_space<vmem>>, %arg13: memref<2x8x32xf32, #tpu.memory_space<vmem>>) attributes {dimension_semantics = [#tpu.dimension_semantics<parallel>, #tpu.dimension_semantics<arbitrary>], iteration_bounds = array<i64: 1, 2>, scalar_prefetch = 0 : i64, scratch_operands = 0 : i64, tpu.core_type = #tpu.core_type<tc>, window_params = [{transform_indices = @transform_0, window_bounds = array<i64: 2, 8, 64>}, {pipeline_mode = #tpu.pipeline_mode<synchronous>, transform_indices = @transform_1, window_bounds = array<i64: 64, 32>}, {pipeline_mode = #tpu.pipeline_mode<synchronous>, transform_indices = @transform_2, window_bounds = array<i64: 1, 32>}, {pipeline_mode = #tpu.pipeline_mode<synchronous>, transform_indices = @transform_3, window_bounds = array<i64: 8, 32>}, {transform_indices = @transform_4, window_bounds = array<i64: 1, 32, 96>}, {transform_indices = @transform_5, window_bounds = array<i64: 1, 1, 96>}, {transform_indices = @transform_6, window_bounds = array<i64: 1, 32, 32>}, {transform_indices = @transform_7, window_bounds = array<i64: 1, 32, 64>}, {transform_indices = @transform_8, window_bounds = array<i64: 1, 1, 64>}, {transform_indices = @transform_9, window_bounds = array<i64: 1, 64, 32>}, {transform_indices = @transform_10, window_bounds = array<i64: 1, 6, 32>}, {transform_indices = @transform_11, window_bounds = array<i64: 2, 8, 32>}]} {
    %c0_i32 = arith.constant 0 : i32
    %0 = arith.cmpi eq, %arg1, %c0_i32 : i32
    %1 = arith.extui %0 : i1 to i32
    %c0_i32_0 = arith.constant 0 : i32
    %2 = arith.cmpi ne, %1, %c0_i32_0 : i32
    scf.if %2 {
      %c0_48 = arith.constant 0 : index
      %c0_49 = arith.constant 0 : index
      %c0_50 = arith.constant 0 : index
      %153 = vector.load %arg2[%c0_48, %c0_49, %c0_50] : memref<2x8x64xf32, #tpu.memory_space<vmem>>, vector<2x8x64xf32>
      %154 = vector.shape_cast %153 : vector<2x8x64xf32> to vector<16x64xf32>
      %155 = arith.truncf %154 : vector<16x64xf32> to vector<16x64xbf16>
      %c0_51 = arith.constant 0 : index
      %c0_52 = arith.constant 0 : index
      %156 = vector.load %arg3[%c0_51, %c0_52] : memref<64x32xbf16, #tpu.memory_space<vmem>>, vector<64x32xbf16>
      %cst_53 = arith.constant dense<0.000000e+00> : vector<16x32xf32>
      %157 = tpu.matmul %155, %156, %cst_53 {dimension_numbers = #tpu.dot_dimension_numbers<[1], [0], [0], [1], [0, 0, 1, 1], [], []>} : vector<16x64xbf16>, vector<64x32xbf16>, vector<16x32xf32> -> vector<16x32xf32>
      %c0_54 = arith.constant 0 : index
      %c0_55 = arith.constant 0 : index
      %158 = vector.load %arg4[%c0_54, %c0_55] : memref<1x32xf32, #tpu.memory_space<vmem>>, vector<1x32xf32>
      %159 = vector.broadcast %158 : vector<1x32xf32> to vector<16x32xf32>
      %160 = arith.addf %157, %159 : vector<16x32xf32>
      %cst_56 = arith.constant 5.65685415 : f32
      %161 = vector.broadcast %cst_56 : f32 to vector<16x32xf32>
      %162 = arith.mulf %160, %161 : vector<16x32xf32>
      %163 = vector.shape_cast %162 : vector<16x32xf32> to vector<2x8x32xf32>
      %c0_57 = arith.constant 0 : index
      %c0_58 = arith.constant 0 : index
      %164 = vector.load %arg5[%c0_57, %c0_58] : memref<8x32xf32, #tpu.memory_space<vmem>>, vector<8x32xf32>
      %165 = vector.shape_cast %164 : vector<8x32xf32> to vector<1x8x32xf32>
      %166 = vector.broadcast %165 : vector<1x8x32xf32> to vector<2x8x32xf32>
      %167 = arith.addf %163, %166 : vector<2x8x32xf32>
      %c0_59 = arith.constant 0 : index
      %c0_60 = arith.constant 0 : index
      %c0_61 = arith.constant 0 : index
      %168 = vector.load %arg13[%c0_59, %c0_60, %c0_61] : memref<2x8x32xf32, #tpu.memory_space<vmem>>, vector<2x8x32xf32>
      tpu.vector_store %arg13[%c0_59, %c0_60, %c0_61], %167 {strides = array<i32>} : memref<2x8x32xf32, #tpu.memory_space<vmem>>, vector<2x8x32xf32>,
    } else {
    }
    %c0 = arith.constant 0 : index
    %c0_1 = arith.constant 0 : index
    %c0_2 = arith.constant 0 : index
    %3 = vector.load %arg13[%c0, %c0_1, %c0_2] : memref<2x8x32xf32, #tpu.memory_space<vmem>>, vector<2x8x32xf32>
    %4 = vector.shape_cast %3 : vector<2x8x32xf32> to vector<16x32xf32>
    %5 = arith.truncf %4 : vector<16x32xf32> to vector<16x32xbf16>
    %c0_3 = arith.constant 0 : index
    %c0_4 = arith.constant 0 : index
    %c0_5 = arith.constant 0 : index
    %6 = vector.load %arg6[%c0_3, %c0_4, %c0_5] : memref<1x32x96xbf16, #tpu.memory_space<vmem>>, vector<1x32x96xbf16>
    %7 = vector.shape_cast %6 : vector<1x32x96xbf16> to vector<32x96xbf16>
    %cst = arith.constant dense<0.000000e+00> : vector<16x96xf32>
    %8 = tpu.matmul %5, %7, %cst {dimension_numbers = #tpu.dot_dimension_numbers<[1], [0], [0], [1], [0, 0, 1, 1], [], []>} : vector<16x32xbf16>, vector<32x96xbf16>, vector<16x96xf32> -> vector<16x96xf32>
    %c0_6 = arith.constant 0 : index
    %c0_7 = arith.constant 0 : index
    %c0_8 = arith.constant 0 : index
    %9 = vector.load %arg7[%c0_6, %c0_7, %c0_8] : memref<1x1x96xf32, #tpu.memory_space<vmem>>, vector<1x1x96xf32>
    %10 = vector.shape_cast %9 : vector<1x1x96xf32> to vector<1x96xf32>
    %11 = vector.broadcast %10 : vector<1x96xf32> to vector<16x96xf32>
    %12 = arith.addf %8, %11 : vector<16x96xf32>
    %13 = vector.extract_strided_slice %12 {offsets = [0, 0], sizes = [16, 8], strides = [1, 1]} : vector<16x96xf32> to vector<16x8xf32>
    %14 = vector.extract_strided_slice %12 {offsets = [0, 8], sizes = [16, 8], strides = [1, 1]} : vector<16x96xf32> to vector<16x8xf32>
    %15 = vector.extract_strided_slice %12 {offsets = [0, 16], sizes = [16, 8], strides = [1, 1]} : vector<16x96xf32> to vector<16x8xf32>
    %16 = vector.extract_strided_slice %12 {offsets = [0, 24], sizes = [16, 8], strides = [1, 1]} : vector<16x96xf32> to vector<16x8xf32>
    %17 = vector.shape_cast %13 : vector<16x8xf32> to vector<1x16x8xf32>
    %18 = vector.shape_cast %14 : vector<16x8xf32> to vector<1x16x8xf32>
    %19 = vector.shape_cast %15 : vector<16x8xf32> to vector<1x16x8xf32>
    %20 = vector.shape_cast %16 : vector<16x8xf32> to vector<1x16x8xf32>
    %21 = tpu.concatenate %17, %18, %19, %20 in 0 : vector<1x16x8xf32>, vector<1x16x8xf32>, vector<1x16x8xf32>, vector<1x16x8xf32> -> vector<4x16x8xf32>
    %22 = vector.shape_cast %21 : vector<4x16x8xf32> to vector<8x8x8xf32>
    %23 = vector.extract_strided_slice %12 {offsets = [0, 32], sizes = [16, 8], strides = [1, 1]} : vector<16x96xf32> to vector<16x8xf32>
    %24 = vector.extract_strided_slice %12 {offsets = [0, 40], sizes = [16, 8], strides = [1, 1]} : vector<16x96xf32> to vector<16x8xf32>
    %25 = vector.extract_strided_slice %12 {offsets = [0, 48], sizes = [16, 8], strides = [1, 1]} : vector<16x96xf32> to vector<16x8xf32>
    %26 = vector.extract_strided_slice %12 {offsets = [0, 56], sizes = [16, 8], strides = [1, 1]} : vector<16x96xf32> to vector<16x8xf32>
    %27 = vector.shape_cast %23 : vector<16x8xf32> to vector<1x16x8xf32>
    %28 = vector.shape_cast %24 : vector<16x8xf32> to vector<1x16x8xf32>
    %29 = vector.shape_cast %25 : vector<16x8xf32> to vector<1x16x8xf32>
    %30 = vector.shape_cast %26 : vector<16x8xf32> to vector<1x16x8xf32>
    %31 = tpu.concatenate %27, %28, %29, %30 in 0 : vector<1x16x8xf32>, vector<1x16x8xf32>, vector<1x16x8xf32>, vector<1x16x8xf32> -> vector<4x16x8xf32>
    %32 = vector.shape_cast %31 : vector<4x16x8xf32> to vector<8x8x8xf32>
    %33 = vector.extract_strided_slice %12 {offsets = [0, 64], sizes = [16, 8], strides = [1, 1]} : vector<16x96xf32> to vector<16x8xf32>
    %34 = vector.extract_strided_slice %12 {offsets = [0, 72], sizes = [16, 8], strides = [1, 1]} : vector<16x96xf32> to vector<16x8xf32>
    %35 = vector.extract_strided_slice %12 {offsets = [0, 80], sizes = [16, 8], strides = [1, 1]} : vector<16x96xf32> to vector<16x8xf32>
    %36 = vector.extract_strided_slice %12 {offsets = [0, 88], sizes = [16, 8], strides = [1, 1]} : vector<16x96xf32> to vector<16x8xf32>
    %37 = vector.shape_cast %33 : vector<16x8xf32> to vector<1x16x8xf32>
    %38 = vector.shape_cast %34 : vector<16x8xf32> to vector<1x16x8xf32>
    %39 = vector.shape_cast %35 : vector<16x8xf32> to vector<1x16x8xf32>
    %40 = vector.shape_cast %36 : vector<16x8xf32> to vector<1x16x8xf32>
    %41 = tpu.concatenate %37, %38, %39, %40 in 0 : vector<1x16x8xf32>, vector<1x16x8xf32>, vector<1x16x8xf32>, vector<1x16x8xf32> -> vector<4x16x8xf32>
    %42 = vector.shape_cast %41 : vector<4x16x8xf32> to vector<8x8x8xf32>
    %43 = arith.truncf %22 : vector<8x8x8xf32> to vector<8x8x8xbf16>
    %44 = arith.truncf %32 : vector<8x8x8xf32> to vector<8x8x8xbf16>
    "tpu.trace_start"() <{level = 10 : i32, message = "gqd,gkd->gqk"}> : () -> ()
    %cst_9 = arith.constant dense<0.000000e+00> : vector<8x8x8xf32>
    %45 = tpu.matmul %43, %44, %cst_9 {dimension_numbers = #tpu.dot_dimension_numbers<[2], [2], [1], [1], [0, 0, 0, 1, 1, 1], [0], [0]>} : vector<8x8x8xbf16>, vector<8x8x8xbf16>, vector<8x8x8xf32> -> vector<8x8x8xf32>
    "tpu.trace_stop"() : () -> ()
    %cst_10 = arith.constant 0.353553385 : f32
    %46 = vector.broadcast %cst_10 : f32 to vector<8x8x8xf32>
    %47 = arith.mulf %45, %46 : vector<8x8x8xf32>
    %cst_11 = arith.constant dense<0xFF800000> : vector<8x8xf32>
    %48 = vector.multi_reduction <maximumf>, %47, %cst_11 [2] : vector<8x8x8xf32> to vector<8x8xf32>
    %49 = vector.shape_cast %48 : vector<8x8xf32> to vector<8x8x1xf32>
    %50 = vector.broadcast %49 : vector<8x8x1xf32> to vector<8x8x8xf32>
    %51 = arith.subf %47, %50 : vector<8x8x8xf32>
    %52 = math.exp %51 : vector<8x8x8xf32>
    %cst_12 = arith.constant dense<0.000000e+00> : vector<8x8xf32>
    %53 = vector.multi_reduction <add>, %52, %cst_12 [2] : vector<8x8x8xf32> to vector<8x8xf32>
    %54 = vector.shape_cast %53 : vector<8x8xf32> to vector<8x8x1xf32>
    %55 = tpu.reciprocal %54 {approx = true} : vector<8x8x1xf32> -> vector<8x8x1xf32>
    %56 = vector.broadcast %55 : vector<8x8x1xf32> to vector<8x8x8xf32>
    %57 = arith.mulf %52, %56 : vector<8x8x8xf32>
    %58 = arith.truncf %57 : vector<8x8x8xf32> to vector<8x8x8xbf16>
    %59 = arith.truncf %42 : vector<8x8x8xf32> to vector<8x8x8xbf16>
    "tpu.trace_start"() <{level = 10 : i32, message = "gqk,gkd->gqd"}> : () -> ()
    %cst_13 = arith.constant dense<0.000000e+00> : vector<8x8x8xf32>
    %60 = tpu.matmul %58, %59, %cst_13 {dimension_numbers = #tpu.dot_dimension_numbers<[2], [1], [1], [2], [0, 0, 0, 1, 1, 2], [0], [0]>} : vector<8x8x8xbf16>, vector<8x8x8xbf16>, vector<8x8x8xf32> -> vector<8x8x8xf32>
    "tpu.trace_stop"() : () -> ()
    %61 = vector.shape_cast %60 : vector<8x8x8xf32> to vector<4x16x8xf32>
    %62 = vector.extract_strided_slice %61 {offsets = [0, 0, 0], sizes = [1, 16, 8], strides = [1, 1, 1]} : vector<4x16x8xf32> to vector<1x16x8xf32>
    %63 = vector.shape_cast %62 : vector<1x16x8xf32> to vector<16x8xf32>
    %64 = vector.extract_strided_slice %61 {offsets = [1, 0, 0], sizes = [1, 16, 8], strides = [1, 1, 1]} : vector<4x16x8xf32> to vector<1x16x8xf32>
    %65 = vector.shape_cast %64 : vector<1x16x8xf32> to vector<16x8xf32>
    %66 = vector.extract_strided_slice %61 {offsets = [2, 0, 0], sizes = [1, 16, 8], strides = [1, 1, 1]} : vector<4x16x8xf32> to vector<1x16x8xf32>
    %67 = vector.shape_cast %66 : vector<1x16x8xf32> to vector<16x8xf32>
    %68 = vector.extract_strided_slice %61 {offsets = [3, 0, 0], sizes = [1, 16, 8], strides = [1, 1, 1]} : vector<4x16x8xf32> to vector<1x16x8xf32>
    %69 = vector.shape_cast %68 : vector<1x16x8xf32> to vector<16x8xf32>
    %70 = tpu.concatenate %63, %65, %67, %69 in 1 : vector<16x8xf32>, vector<16x8xf32>, vector<16x8xf32>, vector<16x8xf32> -> vector<16x32xf32>
    %c0_14 = arith.constant 0 : index
    %c0_15 = arith.constant 0 : index
    %c0_16 = arith.constant 0 : index
    %71 = vector.load %arg12[%c0_14, %c0_15, %c0_16] : memref<1x6x32xf32, #tpu.memory_space<vmem>>, vector<1x6x32xf32>
    %72 = vector.shape_cast %71 : vector<1x6x32xf32> to vector<6x32xf32>
    %73 = vector.extract_strided_slice %72 {offsets = [0, 0], sizes = [1, 32], strides = [1, 1]} : vector<6x32xf32> to vector<1x32xf32>
    %74 = vector.extract_strided_slice %72 {offsets = [1, 0], sizes = [1, 32], strides = [1, 1]} : vector<6x32xf32> to vector<1x32xf32>
    %75 = vector.extract_strided_slice %72 {offsets = [2, 0], sizes = [1, 32], strides = [1, 1]} : vector<6x32xf32> to vector<1x32xf32>
    %76 = vector.extract_strided_slice %72 {offsets = [3, 0], sizes = [1, 32], strides = [1, 1]} : vector<6x32xf32> to vector<1x32xf32>
    %77 = vector.extract_strided_slice %72 {offsets = [4, 0], sizes = [1, 32], strides = [1, 1]} : vector<6x32xf32> to vector<1x32xf32>
    %78 = vector.extract_strided_slice %72 {offsets = [5, 0], sizes = [1, 32], strides = [1, 1]} : vector<6x32xf32> to vector<1x32xf32>
    %79 = arith.truncf %70 : vector<16x32xf32> to vector<16x32xbf16>
    %c0_17 = arith.constant 0 : index
    %c0_18 = arith.constant 0 : index
    %c0_19 = arith.constant 0 : index
    %80 = vector.load %arg8[%c0_17, %c0_18, %c0_19] : memref<1x32x32xbf16, #tpu.memory_space<vmem>>, vector<1x32x32xbf16>
    %81 = vector.shape_cast %80 : vector<1x32x32xbf16> to vector<32x32xbf16>
    %cst_20 = arith.constant dense<0.000000e+00> : vector<16x32xf32>
    %82 = tpu.matmul %79, %81, %cst_20 {dimension_numbers = #tpu.dot_dimension_numbers<[1], [0], [0], [1], [0, 0, 1, 1], [], []>} : vector<16x32xbf16>, vector<32x32xbf16>, vector<16x32xf32> -> vector<16x32xf32>
    %83 = vector.broadcast %73 : vector<1x32xf32> to vector<16x32xf32>
    %84 = arith.addf %82, %83 : vector<16x32xf32>
    %85 = arith.addf %4, %84 : vector<16x32xf32>
    %cst_21 = arith.constant dense<0.000000e+00> : vector<16xf32>
    %86 = vector.multi_reduction <add>, %85, %cst_21 [1] : vector<16x32xf32> to vector<16xf32>
    %87 = vector.shape_cast %86 : vector<16xf32> to vector<16x1xf32>
    %cst_22 = arith.constant 3.200000e+01 : f32
    %88 = vector.broadcast %cst_22 : f32 to vector<16x1xf32>
    %89 = arith.divf %87, %88 : vector<16x1xf32>
    %90 = arith.mulf %85, %85 : vector<16x32xf32>
    %cst_23 = arith.constant dense<0.000000e+00> : vector<16xf32>
    %91 = vector.multi_reduction <add>, %90, %cst_23 [1] : vector<16x32xf32> to vector<16xf32>
    %92 = vector.shape_cast %91 : vector<16xf32> to vector<16x1xf32>
    %cst_24 = arith.constant 3.200000e+01 : f32
    %93 = vector.broadcast %cst_24 : f32 to vector<16x1xf32>
    %94 = arith.divf %92, %93 : vector<16x1xf32>
    %95 = arith.mulf %89, %89 : vector<16x1xf32>
    %96 = arith.subf %94, %95 : vector<16x1xf32>
    %cst_25 = arith.constant 0.000000e+00 : f32
    %97 = vector.broadcast %cst_25 : f32 to vector<16x1xf32>
    %98 = arith.maximumf %96, %97 : vector<16x1xf32>
    %99 = vector.broadcast %89 : vector<16x1xf32> to vector<16x32xf32>
    %100 = arith.subf %85, %99 : vector<16x32xf32>
    %cst_26 = arith.constant 9.99999974E-6 : f32
    %101 = vector.broadcast %cst_26 : f32 to vector<16x1xf32>
    %102 = arith.addf %98, %101 : vector<16x1xf32>
    %103 = math.rsqrt %102 : vector<16x1xf32>
    %104 = vector.broadcast %103 : vector<16x1xf32> to vector<16x32xf32>
    %105 = arith.mulf %100, %104 : vector<16x32xf32>
    %106 = vector.broadcast %75 : vector<1x32xf32> to vector<16x32xf32>
    %107 = arith.mulf %105, %106 : vector<16x32xf32>
    %108 = vector.broadcast %76 : vector<1x32xf32> to vector<16x32xf32>
    %109 = arith.addf %107, %108 : vector<16x32xf32>
    %110 = arith.truncf %109 : vector<16x32xf32> to vector<16x32xbf16>
    %c0_27 = arith.constant 0 : index
    %c0_28 = arith.constant 0 : index
    %c0_29 = arith.constant 0 : index
    %111 = vector.load %arg9[%c0_27, %c0_28, %c0_29] : memref<1x32x64xbf16, #tpu.memory_space<vmem>>, vector<1x32x64xbf16>
    %112 = vector.shape_cast %111 : vector<1x32x64xbf16> to vector<32x64xbf16>
    %cst_30 = arith.constant dense<0.000000e+00> : vector<16x64xf32>
    %113 = tpu.matmul %110, %112, %cst_30 {dimension_numbers = #tpu.dot_dimension_numbers<[1], [0], [0], [1], [0, 0, 1, 1], [], []>} : vector<16x32xbf16>, vector<32x64xbf16>, vector<16x64xf32> -> vector<16x64xf32>
    %c0_31 = arith.constant 0 : index
    %c0_32 = arith.constant 0 : index
    %c0_33 = arith.constant 0 : index
    %114 = vector.load %arg10[%c0_31, %c0_32, %c0_33] : memref<1x1x64xf32, #tpu.memory_space<vmem>>, vector<1x1x64xf32>
    %115 = vector.shape_cast %114 : vector<1x1x64xf32> to vector<1x64xf32>
    %116 = vector.broadcast %115 : vector<1x64xf32> to vector<16x64xf32>
    %117 = arith.addf %113, %116 : vector<16x64xf32>
    %cst_34 = arith.constant 0.000000e+00 : f32
    %118 = vector.broadcast %cst_34 : f32 to vector<16x64xf32>
    %119 = arith.maximumf %117, %118 : vector<16x64xf32>
    %120 = arith.truncf %119 : vector<16x64xf32> to vector<16x64xbf16>
    %c0_35 = arith.constant 0 : index
    %c0_36 = arith.constant 0 : index
    %c0_37 = arith.constant 0 : index
    %121 = vector.load %arg11[%c0_35, %c0_36, %c0_37] : memref<1x64x32xbf16, #tpu.memory_space<vmem>>, vector<1x64x32xbf16>
    %122 = vector.shape_cast %121 : vector<1x64x32xbf16> to vector<64x32xbf16>
    %cst_38 = arith.constant dense<0.000000e+00> : vector<16x32xf32>
    %123 = tpu.matmul %120, %122, %cst_38 {dimension_numbers = #tpu.dot_dimension_numbers<[1], [0], [0], [1], [0, 0, 1, 1], [], []>} : vector<16x64xbf16>, vector<64x32xbf16>, vector<16x32xf32> -> vector<16x32xf32>
    %124 = vector.broadcast %74 : vector<1x32xf32> to vector<16x32xf32>
    %125 = arith.addf %123, %124 : vector<16x32xf32>
    %126 = arith.addf %109, %125 : vector<16x32xf32>
    %cst_39 = arith.constant dense<0.000000e+00> : vector<16xf32>
    %127 = vector.multi_reduction <add>, %126, %cst_39 [1] : vector<16x32xf32> to vector<16xf32>
    %128 = vector.shape_cast %127 : vector<16xf32> to vector<16x1xf32>
    %cst_40 = arith.constant 3.200000e+01 : f32
    %129 = vector.broadcast %cst_40 : f32 to vector<16x1xf32>
    %130 = arith.divf %128, %129 : vector<16x1xf32>
    %131 = arith.mulf %126, %126 : vector<16x32xf32>
    %cst_41 = arith.constant dense<0.000000e+00> : vector<16xf32>
    %132 = vector.multi_reduction <add>, %131, %cst_41 [1] : vector<16x32xf32> to vector<16xf32>
    %133 = vector.shape_cast %132 : vector<16xf32> to vector<16x1xf32>
    %cst_42 = arith.constant 3.200000e+01 : f32
    %134 = vector.broadcast %cst_42 : f32 to vector<16x1xf32>
    %135 = arith.divf %133, %134 : vector<16x1xf32>
    %136 = arith.mulf %130, %130 : vector<16x1xf32>
    %137 = arith.subf %135, %136 : vector<16x1xf32>
    %cst_43 = arith.constant 0.000000e+00 : f32
    %138 = vector.broadcast %cst_43 : f32 to vector<16x1xf32>
    %139 = arith.maximumf %137, %138 : vector<16x1xf32>
    %140 = vector.broadcast %130 : vector<16x1xf32> to vector<16x32xf32>
    %141 = arith.subf %126, %140 : vector<16x32xf32>
    %cst_44 = arith.constant 9.99999974E-6 : f32
    %142 = vector.broadcast %cst_44 : f32 to vector<16x1xf32>
    %143 = arith.addf %139, %142 : vector<16x1xf32>
    %144 = math.rsqrt %143 : vector<16x1xf32>
    %145 = vector.broadcast %144 : vector<16x1xf32> to vector<16x32xf32>
    %146 = arith.mulf %141, %145 : vector<16x32xf32>
    %147 = vector.broadcast %77 : vector<1x32xf32> to vector<16x32xf32>
    %148 = arith.mulf %146, %147 : vector<16x32xf32>
    %149 = vector.broadcast %78 : vector<1x32xf32> to vector<16x32xf32>
    %150 = arith.addf %148, %149 : vector<16x32xf32>
    %151 = vector.shape_cast %150 : vector<16x32xf32> to vector<2x8x32xf32>
    %c0_45 = arith.constant 0 : index
    %c0_46 = arith.constant 0 : index
    %c0_47 = arith.constant 0 : index
    %152 = vector.load %arg13[%c0_45, %c0_46, %c0_47] : memref<2x8x32xf32, #tpu.memory_space<vmem>>, vector<2x8x32xf32>
    tpu.vector_store %arg13[%c0_45, %c0_46, %c0_47], %151 {strides = array<i32>} : memref<2x8x32xf32, #tpu.memory_space<vmem>>, vector<2x8x32xf32>,
    return
  }
  func.func @transform_0(%arg0: i32, %arg1: i32) -> (i32, i32, i32) {
    %c0_i32 = arith.constant 0 : i32
    %c0_i32_0 = arith.constant 0 : i32
    %c0_i32_1 = arith.constant 0 : i32
    return %arg0, %c0_i32, %c0_i32_0 : i32, i32, i32
  }
  func.func @transform_1(%arg0: i32, %arg1: i32) -> (i32, i32) {
    %c0_i32 = arith.constant 0 : i32
    %c0_i32_0 = arith.constant 0 : i32
    %c0_i32_1 = arith.constant 0 : i32
    return %c0_i32, %c0_i32_0 : i32, i32
  }
  func.func @transform_2(%arg0: i32, %arg1: i32) -> (i32, i32) {
    %c0_i32 = arith.constant 0 : i32
    %c0_i32_0 = arith.constant 0 : i32
    %c0_i32_1 = arith.constant 0 : i32
    return %c0_i32, %c0_i32_0 : i32, i32
  }
  func.func @transform_3(%arg0: i32, %arg1: i32) -> (i32, i32) {
    %c0_i32 = arith.constant 0 : i32
    %c0_i32_0 = arith.constant 0 : i32
    %c0_i32_1 = arith.constant 0 : i32
    return %c0_i32, %c0_i32_0 : i32, i32
  }
  func.func @transform_4(%arg0: i32, %arg1: i32) -> (i32, i32, i32) {
    %c0_i32 = arith.constant 0 : i32
    %c0_i32_0 = arith.constant 0 : i32
    %c0_i32_1 = arith.constant 0 : i32
    return %arg1, %c0_i32, %c0_i32_0 : i32, i32, i32
  }
  func.func @transform_5(%arg0: i32, %arg1: i32) -> (i32, i32, i32) {
    %c0_i32 = arith.constant 0 : i32
    %c0_i32_0 = arith.constant 0 : i32
    %c0_i32_1 = arith.constant 0 : i32
    return %arg1, %c0_i32, %c0_i32_0 : i32, i32, i32
  }
  func.func @transform_6(%arg0: i32, %arg1: i32) -> (i32, i32, i32) {
    %c0_i32 = arith.constant 0 : i32
    %c0_i32_0 = arith.constant 0 : i32
    %c0_i32_1 = arith.constant 0 : i32
    return %arg1, %c0_i32, %c0_i32_0 : i32, i32, i32
  }
  func.func @transform_7(%arg0: i32, %arg1: i32) -> (i32, i32, i32) {
    %c0_i32 = arith.constant 0 : i32
    %c0_i32_0 = arith.constant 0 : i32
    %c0_i32_1 = arith.constant 0 : i32
    return %arg1, %c0_i32, %c0_i32_0 : i32, i32, i32
  }
  func.func @transform_8(%arg0: i32, %arg1: i32) -> (i32, i32, i32) {
    %c0_i32 = arith.constant 0 : i32
    %c0_i32_0 = arith.constant 0 : i32
    %c0_i32_1 = arith.constant 0 : i32
    return %arg1, %c0_i32, %c0_i32_0 : i32, i32, i32
  }
  func.func @transform_9(%arg0: i32, %arg1: i32) -> (i32, i32, i32) {
    %c0_i32 = arith.constant 0 : i32
    %c0_i32_0 = arith.constant 0 : i32
    %c0_i32_1 = arith.constant 0 : i32
    return %arg1, %c0_i32, %c0_i32_0 : i32, i32, i32
  }
  func.func @transform_10(%arg0: i32, %arg1: i32) -> (i32, i32, i32) {
    %c0_i32 = arith.constant 0 : i32
    %c0_i32_0 = arith.constant 0 : i32
    %c0_i32_1 = arith.constant 0 : i32
    return %arg1, %c0_i32, %c0_i32_0 : i32, i32, i32
  }
  func.func @transform_11(%arg0: i32, %arg1: i32) -> (i32, i32, i32) {
    %c0_i32 = arith.constant 0 : i32
    %c0_i32_0 = arith.constant 0 : i32
    %c0_i32_1 = arith.constant 0 : i32
    return %arg0, %c0_i32, %c0_i32_0 : i32, i32, i32
  }
}

</mosaic_0001>

<llo_original>
// kernel: tpu_custom_call.1
$region0: #{tpu_custom_call.1}
  #allocation0 [shape = 'u32[]', space=smem, size = 0x4, offset = 0x4, fixed_abs, tag = 'smem constant byte address 0x4 - core index']
  #allocation1 [shape = 'u32[72,128]{1,0:T(1,128)}', space=vmem, size = 0x9000, scoped, tag = 'internal scratch']
  %s0 = inlined_call_operand.vmem [shape: f32[2,8,64], index: 0, kind: input, shape index: {}]
  %s1 = inlined_call_operand.vmem [shape: bf16[64,32], index: 1, kind: input, shape index: {}]
  %s2 = inlined_call_operand.vmem [shape: f32[1,32], index: 2, kind: input, shape index: {}]
  %s3 = inlined_call_operand.vmem [shape: f32[8,32], index: 3, kind: input, shape index: {}]
  %s4 = inlined_call_operand.vmem [shape: bf16[2,32,96], index: 4, kind: input, shape index: {}]
  %s5 = inlined_call_operand.vmem [shape: f32[2,1,96], index: 5, kind: input, shape index: {}]
  %s6 = inlined_call_operand.vmem [shape: bf16[2,32,32], index: 6, kind: input, shape index: {}]
  %s7 = inlined_call_operand.vmem [shape: bf16[2,32,64], index: 7, kind: input, shape index: {}]
  %s8 = inlined_call_operand.vmem [shape: f32[2,1,64], index: 8, kind: input, shape index: {}]
  %s9 = inlined_call_operand.vmem [shape: bf16[2,64,32], index: 9, kind: input, shape index: {}]
  %s10 = inlined_call_operand.vmem [shape: f32[2,6,32], index: 10, kind: input, shape index: {}]
  %s11 = inlined_call_operand.hbm [shape: f32[2,8,32], index: 11, kind: output, shape index: {}]
  %s12 = sld [smem:[#allocation0]]
  $region81: #{tpu_custom_call.1} parent=0
    _
  %s14 = ssub.s32 1, %s12
  %s15 = scalar_select 0, %s14, %s12
  $region1: #{tpu_custom_call.1} parent=0
    #allocation2 [shape = 'u8[8192]{0}', space=vmem, size = 0x2000, scoped, tag = 'output window, operand 0, single buffered']
    #allocation3 [shape = 's32[2]{0}', space=sflag, size = 0x8, scoped, tag = 'scoped memory for tpu_custom_call.1']
    %16 = vsyncpa [#allocation3], 0
    loop: start=0, step=1, limit=4
    $region2: #{tpu_custom_call.1} parent=1 // loop_pre_header
      _
    $region3: #{tpu_custom_call.1} parent=1 // loop_header
      %s18 = sphi 0, %s22
      %p19 = scmp.ge.s32.totalorder %s18, 4
      %s25 = sphi 0, %s37
      %s26 = sphi 0, %s33
      %s27 = sphi 0, %s25
      %s28 = sphi 0, %s26
      %s29 = sphi 0, %s27
      %s30 = sphi 0, %s28
      %s40 = sphi 0, %s42
      %s43 = sphi 0, %s40
      %s44 = sphi 0, %s43
      %s60 = sphi 0, %s44
      %s64 = sphi 0, %s64
      %s66 = sphi 0, %s64
      %s67 = sphi 0, %s66
      %s81 = sphi 0, %s67
      %s85 = sphi 0, %s85
      %s87 = sphi 0, %s85
      %s88 = sphi 0, %s87
      %s102 = sphi 0, %s88
      %s106 = sphi 0, %s106
      %s108 = sphi 0, %s106
      %s109 = sphi 0, %s108
      %s123 = sphi 0, %s109
      %s129 = sphi 0, %s131
      %s132 = sphi 0, %s129
      %s133 = sphi 0, %s132
      %s149 = sphi 0, %s133
      %s155 = sphi 0, %s157
      %s158 = sphi 0, %s155
      %s159 = sphi 0, %s158
      %s175 = sphi 0, %s159
      %s181 = sphi 0, %s183
      %s184 = sphi 0, %s181
      %s185 = sphi 0, %s184
      %s201 = sphi 0, %s185
      %s207 = sphi 0, %s209
      %s210 = sphi 0, %s207
      %s211 = sphi 0, %s210
      %s227 = sphi 0, %s211
      %s233 = sphi 0, %s235
      %s236 = sphi 0, %s233
      %s237 = sphi 0, %s236
      %s253 = sphi 0, %s237
      %s259 = sphi 0, %s261
      %s262 = sphi 0, %s259
      %s263 = sphi 0, %s262
      %s279 = sphi 0, %s263
      %s285 = sphi 0, %s287
      %s288 = sphi 0, %s285
      %s289 = sphi 0, %s288
      %s305 = sphi 0, %s289
      %s311 = sphi 0, %s313
      %s314 = sphi 0, %s311
      %s315 = sphi 0, %s314
      %s331 = sphi 0, %s315
    $region4: #{tpu_custom_call.1} parent=1 // loop_header_branch
      %21 = sbr.rel (%p19) target = $region8
    $region5: #{tpu_custom_call.1} parent=1 // loop_body
      %s23 = ssub.s32 %s18, 1
      %s24 = ssub.s32 %s18, 2
      %s31 = sadd.s32 1, %s26
      %p32 = scmp.ge.s32.totalorder %s31, 2
      %s33 = scalar_select %p32, 0, %s31
      %s34 = sadd.s32 1, %s25
      %s35 = scalar_select %p32, %s34, %s25
      %p36 = scmp.ge.s32.totalorder %s35, 1
      %s37 = scalar_select %p36, 0, %s35
      %s38 = ssub.s32 %s25, %s37
      %p39 = scmp.eq.s32.totalorder %s38, 0
      %s41 = sadd.s32 %s40, 1
      %s42 = scalar_select %p39, %s40, %s41
      %p45 = pneg %p39
      %p46 = scmp.eq.s32.totalorder %s18, 1
      %p47 = por %p45, %p46
      %p48 = scmp.ne.s32.totalorder %s40, %s43
      %p49 = scmp.eq.s32.totalorder %s18, 0
      %p50 = por %p48, %p49
      %p51 = scmp.ne.s32.totalorder %s40, %s43
      %p52 = scmp.eq.s32.totalorder %s23, 1
      %p53 = por %p51, %p52
      %p54 = scmp.ne.s32.totalorder %s43, %s44
      %p55 = scmp.eq.s32.totalorder %s23, 0
      %p56 = por %p54, %p55
      %p57 = scmp.ne.s32.totalorder %s43, %s44
      %p58 = scmp.eq.s32.totalorder %s24, 1
      %p59 = por %p57, %p58
      %p61 = scmp.ne.s32.totalorder %s44, %s60
      %p62 = scmp.eq.s32.totalorder %s24, 0
      %p63 = por %p61, %p62
      %s65 = sadd.s32 %s64, 1
      %p68 = scmp.eq.s32.totalorder %s18, 1
      %p69 = scmp.ne.s32.totalorder %s64, %s66
      %p70 = scmp.eq.s32.totalorder %s18, 0
      %p71 = por %p69, %p70
      %p72 = scmp.ne.s32.totalorder %s64, %s66
      %p73 = scmp.eq.s32.totalorder %s23, 1
      %p74 = por %p72, %p73
      %p75 = scmp.ne.s32.totalorder %s66, %s67
      %p76 = scmp.eq.s32.totalorder %s23, 0
      %p77 = por %p75, %p76
      %p78 = scmp.ne.s32.totalorder %s66, %s67
      %p79 = scmp.eq.s32.totalorder %s24, 1
      %p80 = por %p78, %p79
      %p82 = scmp.ne.s32.totalorder %s67, %s81
      %p83 = scmp.eq.s32.totalorder %s24, 0
      %p84 = por %p82, %p83
      %s86 = sadd.s32 %s85, 1
      %p89 = scmp.eq.s32.totalorder %s18, 1
      %p90 = scmp.ne.s32.totalorder %s85, %s87
      %p91 = scmp.eq.s32.totalorder %s18, 0
      %p92 = por %p90, %p91
      %p93 = scmp.ne.s32.totalorder %s85, %s87
      %p94 = scmp.eq.s32.totalorder %s23, 1
      %p95 = por %p93, %p94
      %p96 = scmp.ne.s32.totalorder %s87, %s88
      %p97 = scmp.eq.s32.totalorder %s23, 0
      %p98 = por %p96, %p97
      %p99 = scmp.ne.s32.totalorder %s87, %s88
      %p100 = scmp.eq.s32.totalorder %s24, 1
      %p101 = por %p99, %p100
      %p103 = scmp.ne.s32.totalorder %s88, %s102
      %p104 = scmp.eq.s32.totalorder %s24, 0
      %p105 = por %p103, %p104
      %s107 = sadd.s32 %s106, 1
      %p110 = scmp.eq.s32.totalorder %s18, 1
      %p111 = scmp.ne.s32.totalorder %s106, %s108
      %p112 = scmp.eq.s32.totalorder %s18, 0
      %p113 = por %p111, %p112
      %p114 = scmp.ne.s32.totalorder %s106, %s108
      %p115 = scmp.eq.s32.totalorder %s23, 1
      %p116 = por %p114, %p115
      %p117 = scmp.ne.s32.totalorder %s108, %s109
      %p118 = scmp.eq.s32.totalorder %s23, 0
      %p119 = por %p117, %p118
      %p120 = scmp.ne.s32.totalorder %s108, %s109
      %p121 = scmp.eq.s32.totalorder %s24, 1
      %p122 = por %p120, %p121
      %p124 = scmp.ne.s32.totalorder %s109, %s123
      %p125 = scmp.eq.s32.totalorder %s24, 0
      %p126 = por %p124, %p125
      %s127 = ssub.s32 %s26, %s33
      %p128 = scmp.eq.s32.totalorder %s127, 0
      %s130 = sadd.s32 %s129, 1
      %s131 = scalar_select %p128, %s129, %s130
      %p134 = pneg %p128
      %p135 = scmp.eq.s32.totalorder %s18, 1
      %p136 = por %p134, %p135
      %p137 = scmp.ne.s32.totalorder %s129, %s132
      %p138 = scmp.eq.s32.totalorder %s18, 0
      %p139 = por %p137, %p138
      %p140 = scmp.ne.s32.totalorder %s129, %s132
      %p141 = scmp.eq.s32.totalorder %s23, 1
      %p142 = por %p140, %p141
      %p143 = scmp.ne.s32.totalorder %s132, %s133
      %p144 = scmp.eq.s32.totalorder %s23, 0
      %p145 = por %p143, %p144
      %p146 = scmp.ne.s32.totalorder %s132, %s133
      %p147 = scmp.eq.s32.totalorder %s24, 1
      %p148 = por %p146, %p147
      %p150 = scmp.ne.s32.totalorder %s133, %s149
      %p151 = scmp.eq.s32.totalorder %s24, 0
      %p152 = por %p150, %p151
      %s153 = ssub.s32 %s26, %s33
      %p154 = scmp.eq.s32.totalorder %s153, 0
      %s156 = sadd.s32 %s155, 1
      %s157 = scalar_select %p154, %s155, %s156
      %p160 = pneg %p154
      %p161 = scmp.eq.s32.totalorder %s18, 1
      %p162 = por %p160, %p161
      %p163 = scmp.ne.s32.totalorder %s155, %s158
      %p164 = scmp.eq.s32.totalorder %s18, 0
      %p165 = por %p163, %p164
      %p166 = scmp.ne.s32.totalorder %s155, %s158
      %p167 = scmp.eq.s32.totalorder %s23, 1
      %p168 = por %p166, %p167
      %p169 = scmp.ne.s32.totalorder %s158, %s159
      %p170 = scmp.eq.s32.totalorder %s23, 0
      %p171 = por %p169, %p170
      %p172 = scmp.ne.s32.totalorder %s158, %s159
      %p173 = scmp.eq.s32.totalorder %s24, 1
      %p174 = por %p172, %p173
      %p176 = scmp.ne.s32.totalorder %s159, %s175
      %p177 = scmp.eq.s32.totalorder %s24, 0
      %p178 = por %p176, %p177
      %s179 = ssub.s32 %s26, %s33
      %p180 = scmp.eq.s32.totalorder %s179, 0
      %s182 = sadd.s32 %s181, 1
      %s183 = scalar_select %p180, %s181, %s182
      %p186 = pneg %p180
      %p187 = scmp.eq.s32.totalorder %s18, 1
      %p188 = por %p186, %p187
      %p189 = scmp.ne.s32.totalorder %s181, %s184
      %p190 = scmp.eq.s32.totalorder %s18, 0
      %p191 = por %p189, %p190
      %p192 = scmp.ne.s32.totalorder %s181, %s184
      %p193 = scmp.eq.s32.totalorder %s23, 1
      %p194 = por %p192, %p193
      %p195 = scmp.ne.s32.totalorder %s184, %s185
      %p196 = scmp.eq.s32.totalorder %s23, 0
      %p197 = por %p195, %p196
      %p198 = scmp.ne.s32.totalorder %s184, %s185
      %p199 = scmp.eq.s32.totalorder %s24, 1
      %p200 = por %p198, %p199
      %p202 = scmp.ne.s32.totalorder %s185, %s201
      %p203 = scmp.eq.s32.totalorder %s24, 0
      %p204 = por %p202, %p203
      %s205 = ssub.s32 %s26, %s33
      %p206 = scmp.eq.s32.totalorder %s205, 0
      %s208 = sadd.s32 %s207, 1
      %s209 = scalar_select %p206, %s207, %s208
      %p212 = pneg %p206
      %p213 = scmp.eq.s32.totalorder %s18, 1
      %p214 = por %p212, %p213
      %p215 = scmp.ne.s32.totalorder %s207, %s210
      %p216 = scmp.eq.s32.totalorder %s18, 0
      %p217 = por %p215, %p216
      %p218 = scmp.ne.s32.totalorder %s207, %s210
      %p219 = scmp.eq.s32.totalorder %s23, 1
      %p220 = por %p218, %p219
      %p221 = scmp.ne.s32.totalorder %s210, %s211
      %p222 = scmp.eq.s32.totalorder %s23, 0
      %p223 = por %p221, %p222
      %p224 = scmp.ne.s32.totalorder %s210, %s211
      %p225 = scmp.eq.s32.totalorder %s24, 1
      %p226 = por %p224, %p225
      %p228 = scmp.ne.s32.totalorder %s211, %s227
      %p229 = scmp.eq.s32.totalorder %s24, 0
      %p230 = por %p228, %p229
      %s231 = ssub.s32 %s26, %s33
      %p232 = scmp.eq.s32.totalorder %s231, 0
      %s234 = sadd.s32 %s233, 1
      %s235 = scalar_select %p232, %s233, %s234
      %p238 = pneg %p232
      %p239 = scmp.eq.s32.totalorder %s18, 1
      %p240 = por %p238, %p239
      %p241 = scmp.ne.s32.totalorder %s233, %s236
      %p242 = scmp.eq.s32.totalorder %s18, 0
      %p243 = por %p241, %p242
      %p244 = scmp.ne.s32.totalorder %s233, %s236
      %p245 = scmp.eq.s32.totalorder %s23, 1
      %p246 = por %p244, %p245
      %p247 = scmp.ne.s32.totalorder %s236, %s237
      %p248 = scmp.eq.s32.totalorder %s23, 0
      %p249 = por %p247, %p248
      %p250 = scmp.ne.s32.totalorder %s236, %s237
      %p251 = scmp.eq.s32.totalorder %s24, 1
      %p252 = por %p250, %p251
      %p254 = scmp.ne.s32.totalorder %s237, %s253
      %p255 = scmp.eq.s32.totalorder %s24, 0
      %p256 = por %p254, %p255
      %s257 = ssub.s32 %s26, %s33
      %p258 = scmp.eq.s32.totalorder %s257, 0
      %s260 = sadd.s32 %s259, 1
      %s261 = scalar_select %p258, %s259, %s260
      %p264 = pneg %p258
      %p265 = scmp.eq.s32.totalorder %s18, 1
      %p266 = por %p264, %p265
      %p267 = scmp.ne.s32.totalorder %s259, %s262
      %p268 = scmp.eq.s32.totalorder %s18, 0
      %p269 = por %p267, %p268
      %p270 = scmp.ne.s32.totalorder %s259, %s262
      %p271 = scmp.eq.s32.totalorder %s23, 1
      %p272 = por %p270, %p271
      %p273 = scmp.ne.s32.totalorder %s262, %s263
      %p274 = scmp.eq.s32.totalorder %s23, 0
      %p275 = por %p273, %p274
      %p276 = scmp.ne.s32.totalorder %s262, %s263
      %p277 = scmp.eq.s32.totalorder %s24, 1
      %p278 = por %p276, %p277
      %p280 = scmp.ne.s32.totalorder %s263, %s279
      %p281 = scmp.eq.s32.totalorder %s24, 0
      %p282 = por %p280, %p281
      %s283 = ssub.s32 %s26, %s33
      %p284 = scmp.eq.s32.totalorder %s283, 0
      %s286 = sadd.s32 %s285, 1
      %s287 = scalar_select %p284, %s285, %s286
      %p290 = pneg %p284
      %p291 = scmp.eq.s32.totalorder %s18, 1
      %p292 = por %p290, %p291
      %p293 = scmp.ne.s32.totalorder %s285, %s288
      %p294 = scmp.eq.s32.totalorder %s18, 0
      %p295 = por %p293, %p294
      %p296 = scmp.ne.s32.totalorder %s285, %s288
      %p297 = scmp.eq.s32.totalorder %s23, 1
      %p298 = por %p296, %p297
      %p299 = scmp.ne.s32.totalorder %s288, %s289
      %p300 = scmp.eq.s32.totalorder %s23, 0
      %p301 = por %p299, %p300
      %p302 = scmp.ne.s32.totalorder %s288, %s289
      %p303 = scmp.eq.s32.totalorder %s24, 1
      %p304 = por %p302, %p303
      %p306 = scmp.ne.s32.totalorder %s289, %s305
      %p307 = scmp.eq.s32.totalorder %s24, 0
      %p308 = por %p306, %p307
      %s309 = ssub.s32 %s25, %s37
      %p310 = scmp.eq.s32.totalorder %s309, 0
      %s312 = sadd.s32 %s311, 1
      %s313 = scalar_select %p310, %s311, %s312
      %p316 = pneg %p310
      %p317 = scmp.eq.s32.totalorder %s18, 1
      %p318 = por %p316, %p317
      %p319 = scmp.ne.s32.totalorder %s311, %s314
      %p320 = scmp.eq.s32.totalorder %s18, 0
      %p321 = por %p319, %p320
      %p322 = scmp.ne.s32.totalorder %s311, %s314
      %p323 = scmp.eq.s32.totalorder %s23, 1
      %p324 = por %p322, %p323
      %p325 = scmp.ne.s32.totalorder %s314, %s315
      %p326 = scmp.eq.s32.totalorder %s23, 0
      %p327 = por %p325, %p326
      %p328 = scmp.ne.s32.totalorder %s314, %s315
      %p329 = scmp.eq.s32.totalorder %s24, 1
      %p330 = por %p328, %p329
      %p332 = scmp.ne.s32.totalorder %s315, %s331
      %p333 = scmp.eq.s32.totalorder %s24, 0
      %p334 = por %p332, %p333
      %p335 = scmp.le.s32.totalorder 1, %s18
      %p336 = scmp.lt.s32.totalorder %s18, 3
      %p337 = pnand %p335, %p336
      %p338 = pneg %p337
      // Predicated region
      $region9: #{tpu_custom_call.1} parent=5 // pred_check
        _
      $region10: #{tpu_custom_call.1} parent=5 // pred_check_branch
        %340 = sbr.rel (%p337) target = $region12
      $region11: #{tpu_custom_call.1} parent=5 // pred_region
        %s341 = ssub.s32 %s18, 1
        // Predicated region
        $region13: #{tpu_custom_call.1} parent=11 // pred_check
          %p342 = pneg %p56
        $region14: #{tpu_custom_call.1} parent=11 // pred_check_branch
          %344 = sbr.rel (%p342) target = $region16
        $region15: #{tpu_custom_call.1} parent=11 // pred_region
          %s345 = smul.u32 2, %s27
          %p346 = scmp.lt.s32.totalorder %s345, 1
          %s347 = scalar_select %p346, %s345, 1
          %s348 = smul.addr %s347, 8
          %s349 = scalar_lea.vmem %s0, %s348
          %s350 = smul.u32 2, %s27
        $region16: #{tpu_custom_call.1} parent=11 // pred_fallthru
          _
        // Predicated region
        $region17: #{tpu_custom_call.1} parent=11 // pred_check
          %p351 = pneg %p77
        $region18: #{tpu_custom_call.1} parent=11 // pred_check_branch
          %353 = sbr.rel (%p351) target = $region20
        $region19: #{tpu_custom_call.1} parent=11 // pred_region
          _
        $region20: #{tpu_custom_call.1} parent=11 // pred_fallthru
          _
        // Predicated region
        $region21: #{tpu_custom_call.1} parent=11 // pred_check
          %p354 = pneg %p98
        $region22: #{tpu_custom_call.1} parent=11 // pred_check_branch
          %356 = sbr.rel (%p354) target = $region24
        $region23: #{tpu_custom_call.1} parent=11 // pred_region
          _
        $region24: #{tpu_custom_call.1} parent=11 // pred_fallthru
          _
        // Predicated region
        $region25: #{tpu_custom_call.1} parent=11 // pred_check
          %p357 = pneg %p119
        $region26: #{tpu_custom_call.1} parent=11 // pred_check_branch
          %359 = sbr.rel (%p357) target = $region28
        $region27: #{tpu_custom_call.1} parent=11 // pred_region
          _
        $region28: #{tpu_custom_call.1} parent=11 // pred_fallthru
          _
      $region12: #{tpu_custom_call.1} parent=5 // pred_fallthru
        _
      %p360 = scmp.lt.s32.totalorder %s18, 2
      // Predicated region
      $region29: #{tpu_custom_call.1} parent=5 // pred_check
        %p361 = pneg %p360
      $region30: #{tpu_custom_call.1} parent=5 // pred_check_branch
        %363 = sbr.rel (%p361) target = $region32
      $region31: #{tpu_custom_call.1} parent=5 // pred_region
        // Predicated region
        $region33: #{tpu_custom_call.1} parent=31 // pred_check
          %p364 = pneg %p139
        $region34: #{tpu_custom_call.1} parent=31 // pred_check_branch
          %366 = sbr.rel (%p364) target = $region36
        $region35: #{tpu_custom_call.1} parent=31 // pred_region
          %p367 = scmp.lt.s32.totalorder %s26, 1
          %s368 = scalar_select %p367, %s26, 1
          %s369 = smul.addr %s368, 4
          %s370 = smul.addr %s369, 4
          %s371 = scalar_lea.vmem %s4, %s370
        $region36: #{tpu_custom_call.1} parent=31 // pred_fallthru
          _
        // Predicated region
        $region37: #{tpu_custom_call.1} parent=31 // pred_check
          %p372 = pneg %p165
        $region38: #{tpu_custom_call.1} parent=31 // pred_check_branch
          %374 = sbr.rel (%p372) target = $region40
        $region39: #{tpu_custom_call.1} parent=31 // pred_region
          %p375 = scmp.lt.s32.totalorder %s26, 1
          %s376 = scalar_select %p375, %s26, 1
          %s377 = scalar_lea.vmem %s5, %s376
        $region40: #{tpu_custom_call.1} parent=31 // pred_fallthru
          _
        // Predicated region
        $region41: #{tpu_custom_call.1} parent=31 // pred_check
          %p378 = pneg %p191
        $region42: #{tpu_custom_call.1} parent=31 // pred_check_branch
          %380 = sbr.rel (%p378) target = $region44
        $region43: #{tpu_custom_call.1} parent=31 // pred_region
          %p381 = scmp.lt.s32.totalorder %s26, 1
          %s382 = scalar_select %p381, %s26, 1
          %s383 = smul.addr %s382, 4
          %s384 = smul.addr %s383, 4
          %s385 = scalar_lea.vmem %s6, %s384
        $region44: #{tpu_custom_call.1} parent=31 // pred_fallthru
          _
        // Predicated region
        $region45: #{tpu_custom_call.1} parent=31 // pred_check
          %p386 = pneg %p217
        $region46: #{tpu_custom_call.1} parent=31 // pred_check_branch
          %388 = sbr.rel (%p386) target = $region48
        $region47: #{tpu_custom_call.1} parent=31 // pred_region
          %p389 = scmp.lt.s32.totalorder %s26, 1
          %s390 = scalar_select %p389, %s26, 1
          %s391 = smul.addr %s390, 4
          %s392 = smul.addr %s391, 4
          %s393 = scalar_lea.vmem %s7, %s392
        $region48: #{tpu_custom_call.1} parent=31 // pred_fallthru
          _
        // Predicated region
        $region49: #{tpu_custom_call.1} parent=31 // pred_check
          %p394 = pneg %p243
        $region50: #{tpu_custom_call.1} parent=31 // pred_check_branch
          %396 = sbr.rel (%p394) target = $region52
        $region51: #{tpu_custom_call.1} parent=31 // pred_region
          %p397 = scmp.lt.s32.totalorder %s26, 1
          %s398 = scalar_select %p397, %s26, 1
          %s399 = scalar_lea.vmem %s8, %s398
        $region52: #{tpu_custom_call.1} parent=31 // pred_fallthru
          _
        // Predicated region
        $region53: #{tpu_custom_call.1} parent=31 // pred_check
          %p400 = pneg %p269
        $region54: #{tpu_custom_call.1} parent=31 // pred_check_branch
          %402 = sbr.rel (%p400) target = $region56
        $region55: #{tpu_custom_call.1} parent=31 // pred_region
          %p403 = scmp.lt.s32.totalorder %s26, 1
          %s404 = scalar_select %p403, %s26, 1
          %s405 = smul.addr %s404, 8
          %s406 = smul.addr %s405, 4
          %s407 = scalar_lea.vmem %s9, %s406
        $region56: #{tpu_custom_call.1} parent=31 // pred_fallthru
          _
        // Predicated region
        $region57: #{tpu_custom_call.1} parent=31 // pred_check
          %p408 = pneg %p295
        $region58: #{tpu_custom_call.1} parent=31 // pred_check_branch
          %410 = sbr.rel (%p408) target = $region60
        $region59: #{tpu_custom_call.1} parent=31 // pred_region
          %p411 = scmp.lt.s32.totalorder %s26, 1
          %s412 = scalar_select %p411, %s26, 1
          %s413 = smul.addr %s412, 8
          %s414 = scalar_lea.vmem %s10, %s413
        $region60: #{tpu_custom_call.1} parent=31 // pred_fallthru
          _
      $region32: #{tpu_custom_call.1} parent=5 // pred_fallthru
        _
      %p415 = scmp.le.s32.totalorder 1, %s18
      %p416 = scmp.lt.s32.totalorder %s18, 3
      %p417 = pnand %p415, %p416
      %p418 = pneg %p417
      // Predicated region
      $region61: #{tpu_custom_call.1} parent=5 // pred_check
        _
      $region62: #{tpu_custom_call.1} parent=5 // pred_check_branch
        %420 = sbr.rel (%p417) target = $region64
      $region63: #{tpu_custom_call.1} parent=5 // pred_region
        %s421 = ssub.s32 %s18, 1
        %s422 = smul.u32 2, %s27
        %p423 = scmp.lt.s32.totalorder %s422, 1
        %s424 = scalar_select %p423, %s422, 1
        %s425 = smul.addr %s424, 8
        %s426 = scalar_lea.vmem %s0, %s425
        %p427 = pneg %p56
        %p428 = pneg %p53
        %p429 = pneg %p77
        %p430 = pneg %p74
        %p431 = pneg %p98
        %p432 = pneg %p95
        %p433 = pneg %p119
        %p434 = pneg %p116
        %p435 = scmp.lt.s32.totalorder %s28, 1
        %s436 = scalar_select %p435, %s28, 1
        %s437 = smul.addr %s436, 4
        %s438 = smul.addr %s437, 4
        %s439 = scalar_lea.vmem %s4, %s438
        %p440 = pneg %p145
        %p441 = pneg %p142
        %p442 = scmp.lt.s32.totalorder %s28, 1
        %s443 = scalar_select %p442, %s28, 1
        %s444 = scalar_lea.vmem %s5, %s443
        %p445 = pneg %p171
        %p446 = pneg %p168
        %p447 = scmp.lt.s32.totalorder %s28, 1
        %s448 = scalar_select %p447, %s28, 1
        %s449 = smul.addr %s448, 4
        %s450 = smul.addr %s449, 4
        %s451 = scalar_lea.vmem %s6, %s450
        %p452 = pneg %p197
        %p453 = pneg %p194
        %p454 = scmp.lt.s32.totalorder %s28, 1
        %s455 = scalar_select %p454, %s28, 1
        %s456 = smul.addr %s455, 4
        %s457 = smul.addr %s456, 4
        %s458 = scalar_lea.vmem %s7, %s457
        %p459 = pneg %p223
        %p460 = pneg %p220
        %p461 = scmp.lt.s32.totalorder %s28, 1
        %s462 = scalar_select %p461, %s28, 1
        %s463 = scalar_lea.vmem %s8, %s462
        %p464 = pneg %p249
        %p465 = pneg %p246
        %p466 = scmp.lt.s32.totalorder %s28, 1
        %s467 = scalar_select %p466, %s28, 1
        %s468 = smul.addr %s467, 8
        %s469 = smul.addr %s468, 4
        %s470 = scalar_lea.vmem %s9, %s469
        %p471 = pneg %p275
        %p472 = pneg %p272
        %p473 = scmp.lt.s32.totalorder %s28, 1
        %s474 = scalar_select %p473, %s28, 1
        %s475 = smul.addr %s474, 8
        %s476 = scalar_lea.vmem %s10, %s475
        %p477 = pneg %p301
        %p478 = pneg %p298
        %p479 = pneg %p327
        %p480 = pneg %p324
        %s481 = smul.u32 2, %s27
        %p482 = scmp.lt.s32.totalorder %s481, 1
        %s483 = scalar_select %p482, %s481, 1
        %s484 = smul.addr %s483, 8
        %s485 = scalar_lea.vmem %s0, %s484
        %s486 = smul.u32 2, %s27
        %p487 = scmp.lt.s32.totalorder %s28, 1
        %s488 = scalar_select %p487, %s28, 1
        %s489 = smul.addr %s488, 4
        %s490 = smul.addr %s489, 4
        %s491 = scalar_lea.vmem %s4, %s490
        %p492 = scmp.lt.s32.totalorder %s28, 1
        %s493 = scalar_select %p492, %s28, 1
        %s494 = scalar_lea.vmem %s5, %s493
        %p495 = scmp.lt.s32.totalorder %s28, 1
        %s496 = scalar_select %p495, %s28, 1
        %s497 = smul.addr %s496, 4
        %s498 = smul.addr %s497, 4
        %s499 = scalar_lea.vmem %s6, %s498
        %p500 = scmp.lt.s32.totalorder %s28, 1
        %s501 = scalar_select %p500, %s28, 1
        %s502 = smul.addr %s501, 4
        %s503 = smul.addr %s502, 4
        %s504 = scalar_lea.vmem %s7, %s503
        %p505 = scmp.lt.s32.totalorder %s28, 1
        %s506 = scalar_select %p505, %s28, 1
        %s507 = scalar_lea.vmem %s8, %s506
        %p508 = scmp.lt.s32.totalorder %s28, 1
        %s509 = scalar_select %p508, %s28, 1
        %s510 = smul.addr %s509, 8
        %s511 = smul.addr %s510, 4
        %s512 = scalar_lea.vmem %s9, %s511
        %p513 = scmp.lt.s32.totalorder %s28, 1
        %s514 = scalar_select %p513, %s28, 1
        %s515 = smul.addr %s514, 8
        %s516 = scalar_lea.vmem %s10, %s515
        %s517 = smul.u32 2, %s27
        %p519 = scmp.eq.s32.totalorder %s28, 0
        // Predicated region
        $region65: #{tpu_custom_call.1} parent=63 // pred_check
          %p520 = pneg %p519
        $region66: #{tpu_custom_call.1} parent=63 // pred_check_branch
          %522 = sbr.rel (%p520) target = $region68
        $region67: #{tpu_custom_call.1} parent=63 // pred_region
          %v523 = vld [vmem:[%s485] sm:$0xff]
          %v524 = vld [vmem:[%s485 + $0x8] sm:$0xff]
          %v525 = vpack.c.bf16 %v524, %v523
          %v526 = vld [vmem:[%s1] sm:$0xf]
          %v527 = vld [vmem:[%s1 + $0x4] sm:$0xf]
          %v528 = vld [vmem:[%s1 + $0x8] sm:$0xf]
          %v529 = vld [vmem:[%s1 + $0xc] sm:$0xf]
          %v530 = vld [vmem:[%s1 + $0x10] sm:$0xf]
          %v531 = vld [vmem:[%s1 + $0x14] sm:$0xf]
          %v532 = vld [vmem:[%s1 + $0x18] sm:$0xf]
          %v533 = vld [vmem:[%s1 + $0x1c] sm:$0xf]
          %v534 = vld [vmem:[%s2] sm:$0x1]
          %v536 = vperm.slane %v534, 0
          %v546 = vunpack.c.l.b16 %v526
          %v547 = vunpack.c.l.b16 %v527
          %v548 = vunpack.c.l.b16 %v528
          %v549 = vunpack.c.l.b16 %v529
          %v550 = vunpack.c.l.b16 %v530
          %v551 = vunpack.c.l.b16 %v531
          %v552 = vunpack.c.l.b16 %v532
          %v553 = vunpack.c.l.b16 %v533
          %v554 = vpack.c.b16 %v547, %v546
          %v555 = vpack.c.b16 %v549, %v548
          %v556 = vpack.c.b16 %v551, %v550
          %v557 = vpack.c.b16 %v553, %v552
          %vm562 = vcmask 523264
          %v564 = vsel %vm562, %v525, 0
          %566 = vmatpush.bf16.msra.mxu0 0
          %567 = vmatpush.bf16.msra.mxu0 0
          %568 = vmatpush.bf16.msra.mxu0 0
          %569 = vmatpush.bf16.msra.mxu0 0
          %570 = vmatpush.bf16.msra.mxu0 %v557
          %571 = vmatpush.bf16.msra.mxu0 %v556
          %572 = vmatpush.bf16.msra.mxu0 %v555
          %573 = vmatpush.bf16.msra.mxu0 %v554
          %574 = vmatmul.bf16.gmra.mxu0 %v564
          %v575 = vpop.f32.mrf.mxu0
          %v576 = vadd.f32 %v536, %v575
          %v577 = vpop.f32.mrf.mxu0
          %v578 = vadd.f32 %v536, %v577
          %579 = vdwg.mxu0
          %v580 = vmul.f32 %v576, 5.656854
          %v581 = vmul.f32 %v578, 5.656854
          %v582 = vld [vmem:[%s3] sm:$0xff]
          %v583 = vadd.f32 %v580, %v582
          %v584 = vadd.f32 %v581, %v582
          %vm585 = vcmask 261120
          %586 = vst.msk [vmem:[#allocation2] sm:$0xff] %vm585, %v583
          %587 = vst.msk [vmem:[#allocation2 + $0x8] sm:$0xff] %vm585, %v584
        $region68: #{tpu_custom_call.1} parent=63 // pred_fallthru
          _
        %v588 = vld [vmem:[#allocation2] sm:$0xff]
        %v589 = vld [vmem:[#allocation2 + $0x8] sm:$0xff]
        %v590 = vpack.c.bf16 %v589, %v588
        %v591 = vld [vmem:[%s491] sm:$0xf]
        %v592 = vld [vmem:[%s491 + $0x4] sm:$0xf]
        %v593 = vld [vmem:[%s491 + $0x8] sm:$0xf]
        %v594 = vld [vmem:[%s491 + $0xc] sm:$0xf]
        %v595 = vld [vmem:[%s494] sm:$0x1]
        %v597 = vperm.slane %v595, 0
        %v603 = vunpack.c.l.b16 %v591
        %v604 = vunpack.c.l.b16 %v592
        %v605 = vunpack.c.l.b16 %v593
        %v606 = vunpack.c.l.b16 %v594
        %v607 = vpack.c.b16 %v604, %v603
        %v608 = vpack.c.b16 %v606, %v605
        %vm611 = vcmask 261120
        %v613 = vsel %vm611, %v590, 0
        %615 = vmatpush.bf16.msra.mxu0 0
        %616 = vmatpush.bf16.msra.mxu0 0
        %617 = vmatpush.bf16.msra.mxu0 0
        %618 = vmatpush.bf16.msra.mxu0 0
        %619 = vmatpush.bf16.msra.mxu0 0
        %620 = vmatpush.bf16.msra.mxu0 0
        %621 = vmatpush.bf16.msra.mxu0 %v608
        %622 = vmatpush.bf16.msra.mxu0 %v607
        %623 = vmatmul.bf16.gmra.mxu0 %v613
        %v624 = vpop.f32.mrf.mxu0
        %v625 = vadd.f32 %v597, %v624
        %v626 = vpop.f32.mrf.mxu0
        %v627 = vadd.f32 %v597, %v626
        %628 = vdwg.mxu0
        %631 = vrot.lane.b32.xlu0 %v625, 120
        %v632 = vpop.permute.xlu0 %631
        %633 = vrot.lane.b32.xlu0 %v627, 120
        %v634 = vpop.permute.xlu0 %633
        %637 = vrot.lane.b32.xlu0 %v625, 112
        %v638 = vpop.permute.xlu0 %637
        %639 = vrot.lane.b32.xlu0 %v627, 112
        %v640 = vpop.permute.xlu0 %639
        %643 = vrot.lane.b32.xlu0 %v625, 104
        %v644 = vpop.permute.xlu0 %643
        %645 = vrot.lane.b32.xlu0 %v627, 104
        %v646 = vpop.permute.xlu0 %645
        %v649 = vpack.c.bf16 %v625, %v625
        %v650 = vpack.c.bf16 %v627, %v627
        %v651 = vpack.c.bf16 %v632, %v632
        %v652 = vpack.c.bf16 %v634, %v634
        %v653 = vpack.c.bf16 %v638, %v638
        %v654 = vpack.c.bf16 %v640, %v640
        %v655 = vpack.c.bf16 %v644, %v644
        %v656 = vpack.c.bf16 %v646, %v646
        %v658 = vunpack.c.l.b16 %v649
        %v659 = vpack.c.b16 %v658, %v658
        %660 = vrot.lane.b32.xlu0 %v659, 96
        %v661 = vpop.permute.xlu0 %660
        %vm662 = vcmask 64512
        %v664 = vsel %vm662, %v649, 0
        %v667 = vsel %vm662, %v661, 0
        %669 = vmatpush.bf16.xpose.msra.mxu0 0
        %670 = vmatpush.bf16.xpose.msra.mxu0 0
        %671 = vmatpush.bf16.xpose.msra.mxu0 0
        %672 = vmatpush.bf16.xpose.msra.mxu0 0
        %673 = vmatpush.bf16.xpose.msra.mxu0 0
        %674 = vmatpush.bf16.xpose.msra.mxu0 0
        %675 = vmatpush.bf16.xpose.msra.mxu0 0
        %676 = vmatpush.bf16.xpose.msra.mxu0 %v667
        %677 = vmatmul.bf16.gmra.mxu0 %v664
        %v678 = vpop.f32.mrf.mxu0
        %v679 = vadd.f32 0.0, %v678
        %v680 = vpop.f32.mrf.mxu0
        %681 = vdwg.mxu0
        %v683 = vunpack.c.l.b16 %v650
        %v684 = vpack.c.b16 %v683, %v683
        %685 = vrot.lane.b32.xlu0 %v684, 96
        %v686 = vpop.permute.xlu0 %685
        %v688 = vsel %vm662, %v650, 0
        %v691 = vsel %vm662, %v686, 0
        %693 = vmatpush.bf16.xpose.msra.mxu0 0
        %694 = vmatpush.bf16.xpose.msra.mxu0 0
        %695 = vmatpush.bf16.xpose.msra.mxu0 0
        %696 = vmatpush.bf16.xpose.msra.mxu0 0
        %697 = vmatpush.bf16.xpose.msra.mxu0 0
        %698 = vmatpush.bf16.xpose.msra.mxu0 0
        %699 = vmatpush.bf16.xpose.msra.mxu0 0
        %700 = vmatpush.bf16.xpose.msra.mxu0 %v691
        %701 = vmatmul.bf16.gmra.mxu0 %v688
        %v702 = vpop.f32.mrf.mxu0
        %v703 = vadd.f32 0.0, %v702
        %v704 = vpop.f32.mrf.mxu0
        %705 = vdwg.mxu0
        %v707 = vunpack.c.l.b16 %v651
        %v708 = vpack.c.b16 %v707, %v707
        %709 = vrot.lane.b32.xlu0 %v708, 96
        %v710 = vpop.permute.xlu0 %709
        %v712 = vsel %vm662, %v651, 0
        %v715 = vsel %vm662, %v710, 0
        %717 = vmatpush.bf16.xpose.msra.mxu0 0
        %718 = vmatpush.bf16.xpose.msra.mxu0 0
        %719 = vmatpush.bf16.xpose.msra.mxu0 0
        %720 = vmatpush.bf16.xpose.msra.mxu0 0
        %721 = vmatpush.bf16.xpose.msra.mxu0 0
        %722 = vmatpush.bf16.xpose.msra.mxu0 0
        %723 = vmatpush.bf16.xpose.msra.mxu0 0
        %724 = vmatpush.bf16.xpose.msra.mxu0 %v715
        %725 = vmatmul.bf16.gmra.mxu0 %v712
        %v726 = vpop.f32.mrf.mxu0
        %v727 = vadd.f32 0.0, %v726
        %v728 = vpop.f32.mrf.mxu0
        %729 = vdwg.mxu0
        %v731 = vunpack.c.l.b16 %v652
        %v732 = vpack.c.b16 %v731, %v731
        %733 = vrot.lane.b32.xlu0 %v732, 96
        %v734 = vpop.permute.xlu0 %733
        %v736 = vsel %vm662, %v652, 0
        %v739 = vsel %vm662, %v734, 0
        %741 = vmatpush.bf16.xpose.msra.mxu0 0
        %742 = vmatpush.bf16.xpose.msra.mxu0 0
        %743 = vmatpush.bf16.xpose.msra.mxu0 0
        %744 = vmatpush.bf16.xpose.msra.mxu0 0
        %745 = vmatpush.bf16.xpose.msra.mxu0 0
        %746 = vmatpush.bf16.xpose.msra.mxu0 0
        %747 = vmatpush.bf16.xpose.msra.mxu0 0
        %748 = vmatpush.bf16.xpose.msra.mxu0 %v739
        %749 = vmatmul.bf16.gmra.mxu0 %v736
        %v750 = vpop.f32.mrf.mxu0
        %v751 = vadd.f32 0.0, %v750
        %v752 = vpop.f32.mrf.mxu0
        %753 = vdwg.mxu0
        %v755 = vunpack.c.l.b16 %v653
        %v756 = vpack.c.b16 %v755, %v755
        %757 = vrot.lane.b32.xlu0 %v756, 96
        %v758 = vpop.permute.xlu0 %757
        %v760 = vsel %vm662, %v653, 0
        %v763 = vsel %vm662, %v758, 0
        %765 = vmatpush.bf16.xpose.msra.mxu0 0
        %766 = vmatpush.bf16.xpose.msra.mxu0 0
        %767 = vmatpush.bf16.xpose.msra.mxu0 0
        %768 = vmatpush.bf16.xpose.msra.mxu0 0
        %769 = vmatpush.bf16.xpose.msra.mxu0 0
        %770 = vmatpush.bf16.xpose.msra.mxu0 0
        %771 = vmatpush.bf16.xpose.msra.mxu0 0
        %772 = vmatpush.bf16.xpose.msra.mxu0 %v763
        %773 = vmatmul.bf16.gmra.mxu0 %v760
        %v774 = vpop.f32.mrf.mxu0
        %v775 = vadd.f32 0.0, %v774
        %v776 = vpop.f32.mrf.mxu0
        %777 = vdwg.mxu0
        %v779 = vunpack.c.l.b16 %v654
        %v780 = vpack.c.b16 %v779, %v779
        %781 = vrot.lane.b32.xlu0 %v780, 96
        %v782 = vpop.permute.xlu0 %781
        %v784 = vsel %vm662, %v654, 0
        %v787 = vsel %vm662, %v782, 0
        %789 = vmatpush.bf16.xpose.msra.mxu0 0
        %790 = vmatpush.bf16.xpose.msra.mxu0 0
        %791 = vmatpush.bf16.xpose.msra.mxu0 0
        %792 = vmatpush.bf16.xpose.msra.mxu0 0
        %793 = vmatpush.bf16.xpose.msra.mxu0 0
        %794 = vmatpush.bf16.xpose.msra.mxu0 0
        %795 = vmatpush.bf16.xpose.msra.mxu0 0
        %796 = vmatpush.bf16.xpose.msra.mxu0 %v787
        %797 = vmatmul.bf16.gmra.mxu0 %v784
        %v798 = vpop.f32.mrf.mxu0
        %v799 = vadd.f32 0.0, %v798
        %v800 = vpop.f32.mrf.mxu0
        %801 = vdwg.mxu0
        %v803 = vunpack.c.l.b16 %v655
        %v804 = vpack.c.b16 %v803, %v803
        %805 = vrot.lane.b32.xlu0 %v804, 96
        %v806 = vpop.permute.xlu0 %805
        %v808 = vsel %vm662, %v655, 0
        %v811 = vsel %vm662, %v806, 0
        %813 = vmatpush.bf16.xpose.msra.mxu0 0
        %814 = vmatpush.bf16.xpose.msra.mxu0 0
        %815 = vmatpush.bf16.xpose.msra.mxu0 0
        %816 = vmatpush.bf16.xpose.msra.mxu0 0
        %817 = vmatpush.bf16.xpose.msra.mxu0 0
        %818 = vmatpush.bf16.xpose.msra.mxu0 0
        %819 = vmatpush.bf16.xpose.msra.mxu0 0
        %820 = vmatpush.bf16.xpose.msra.mxu0 %v811
        %821 = vmatmul.bf16.gmra.mxu0 %v808
        %v822 = vpop.f32.mrf.mxu0
        %v823 = vadd.f32 0.0, %v822
        %v824 = vpop.f32.mrf.mxu0
        %825 = vdwg.mxu0
        %v827 = vunpack.c.l.b16 %v656
        %v828 = vpack.c.b16 %v827, %v827
        %829 = vrot.lane.b32.xlu0 %v828, 96
        %v830 = vpop.permute.xlu0 %829
        %v832 = vsel %vm662, %v656, 0
        %v835 = vsel %vm662, %v830, 0
        %837 = vmatpush.bf16.xpose.msra.mxu0 0
        %838 = vmatpush.bf16.xpose.msra.mxu0 0
        %839 = vmatpush.bf16.xpose.msra.mxu0 0
        %840 = vmatpush.bf16.xpose.msra.mxu0 0
        %841 = vmatpush.bf16.xpose.msra.mxu0 0
        %842 = vmatpush.bf16.xpose.msra.mxu0 0
        %843 = vmatpush.bf16.xpose.msra.mxu0 0
        %844 = vmatpush.bf16.xpose.msra.mxu0 %v835
        %845 = vmatmul.bf16.gmra.mxu0 %v832
        %v846 = vpop.f32.mrf.mxu0
        %v847 = vadd.f32 0.0, %v846
        %v848 = vpop.f32.mrf.mxu0
        %849 = vdwg.mxu0
        %v850 = vmul.f32 %v679, 0.35355338
        %v851 = vmul.f32 %v703, 0.35355338
        %v852 = vmul.f32 %v727, 0.35355338
        %v853 = vmul.f32 %v751, 0.35355338
        %v854 = vmul.f32 %v775, 0.35355338
        %v855 = vmul.f32 %v799, 0.35355338
        %v856 = vmul.f32 %v823, 0.35355338
        %v857 = vmul.f32 %v847, 0.35355338
        %v858 = vsel %vm662, %v850, -inf
        %859 = vmax.xlane.f32.xlu0 %v858
        %v860 = vpop.xlane.xlu0 %859
        %v861 = vsel %vm662, %v851, -inf
        %862 = vmax.xlane.f32.xlu0 %v861
        %v863 = vpop.xlane.xlu0 %862
        %v864 = vsel %vm662, %v852, -inf
        %865 = vmax.xlane.f32.xlu0 %v864
        %v866 = vpop.xlane.xlu0 %865
        %v867 = vsel %vm662, %v853, -inf
        %868 = vmax.xlane.f32.xlu0 %v867
        %v869 = vpop.xlane.xlu0 %868
        %v870 = vsel %vm662, %v854, -inf
        %871 = vmax.xlane.f32.xlu0 %v870
        %v872 = vpop.xlane.xlu0 %871
        %v873 = vsel %vm662, %v855, -inf
        %874 = vmax.xlane.f32.xlu0 %v873
        %v875 = vpop.xlane.xlu0 %874
        %v876 = vsel %vm662, %v856, -inf
        %877 = vmax.xlane.f32.xlu0 %v876
        %v878 = vpop.xlane.xlu0 %877
        %v879 = vsel %vm662, %v857, -inf
        %880 = vmax.xlane.f32.xlu0 %v879
        %v881 = vpop.xlane.xlu0 %880
        %v882 = vsub.f32 %v850, %v860
        %v883 = vsub.f32 %v851, %v863
        %v884 = vsub.f32 %v852, %v866
        %v885 = vsub.f32 %v853, %v869
        %v886 = vsub.f32 %v854, %v872
        %v887 = vsub.f32 %v855, %v875
        %v888 = vsub.f32 %v856, %v878
        %v889 = vsub.f32 %v857, %v881
        %v890 = vmul.f32 %v882, 1.442695
        %v891 = vpow.pop %v890
        %v892 = vmul.f32 %v883, 1.442695
        %v893 = vpow.pop %v892
        %v894 = vmul.f32 %v884, 1.442695
        %v895 = vpow.pop %v894
        %v896 = vmul.f32 %v885, 1.442695
        %v897 = vpow.pop %v896
        %v898 = vmul.f32 %v886, 1.442695
        %v899 = vpow.pop %v898
        %v900 = vmul.f32 %v887, 1.442695
        %v901 = vpow.pop %v900
        %v902 = vmul.f32 %v888, 1.442695
        %v903 = vpow.pop %v902
        %v904 = vmul.f32 %v889, 1.442695
        %v905 = vpow.pop %v904
        %v906 = vsel %vm662, %v891, 0.0
        %907 = vadd.xlane.f32.xlu0 %v906
        %v908 = vpop.xlane.xlu0 %907
        %v909 = vsel %vm662, %v893, 0.0
        %910 = vadd.xlane.f32.xlu0 %v909
        %v911 = vpop.xlane.xlu0 %910
        %v912 = vsel %vm662, %v895, 0.0
        %913 = vadd.xlane.f32.xlu0 %v912
        %v914 = vpop.xlane.xlu0 %913
        %v915 = vsel %vm662, %v897, 0.0
        %916 = vadd.xlane.f32.xlu0 %v915
        %v917 = vpop.xlane.xlu0 %916
        %v918 = vsel %vm662, %v899, 0.0
        %919 = vadd.xlane.f32.xlu0 %v918
        %v920 = vpop.xlane.xlu0 %919
        %v921 = vsel %vm662, %v901, 0.0
        %922 = vadd.xlane.f32.xlu0 %v921
        %v923 = vpop.xlane.xlu0 %922
        %v924 = vsel %vm662, %v903, 0.0
        %925 = vadd.xlane.f32.xlu0 %v924
        %v926 = vpop.xlane.xlu0 %925
        %v927 = vsel %vm662, %v905, 0.0
        %928 = vadd.xlane.f32.xlu0 %v927
        %v929 = vpop.xlane.xlu0 %928
        %v930 = vrcp.pop %v908
        %v931 = vrcp.pop %v911
        %v932 = vrcp.pop %v914
        %v933 = vrcp.pop %v917
        %v934 = vrcp.pop %v920
        %v935 = vrcp.pop %v923
        %v936 = vrcp.pop %v926
        %v937 = vrcp.pop %v929
        %v938 = vmul.f32 %v891, %v930
        %v939 = vmul.f32 %v893, %v931
        %v940 = vmul.f32 %v895, %v932
        %v941 = vmul.f32 %v897, %v933
        %v942 = vmul.f32 %v899, %v934
        %v943 = vmul.f32 %v901, %v935
        %v944 = vmul.f32 %v903, %v936
        %v945 = vmul.f32 %v905, %v937
        %v946 = vpack.c.bf16 %v938, %v938
        %v947 = vpack.c.bf16 %v939, %v939
        %v948 = vpack.c.bf16 %v940, %v940
        %v949 = vpack.c.bf16 %v941, %v941
        %v950 = vpack.c.bf16 %v942, %v942
        %v951 = vpack.c.bf16 %v943, %v943
        %v952 = vpack.c.bf16 %v944, %v944
        %v953 = vpack.c.bf16 %v945, %v945
        %954 = vrot.lane.b32.xlu0 %v659, 64
        %v955 = vpop.permute.xlu0 %954
        %v957 = vsel %vm662, %v946, 0
        %vm959 = vcmask 1043456
        %v961 = vsel %vm959, %v955, 0
        %963 = vmatpush.bf16.msra.mxu0 0
        %964 = vmatpush.bf16.msra.mxu0 0
        %965 = vmatpush.bf16.msra.mxu0 0
        %966 = vmatpush.bf16.msra.mxu0 0
        %967 = vmatpush.bf16.msra.mxu0 0
        %968 = vmatpush.bf16.msra.mxu0 0
        %969 = vmatpush.bf16.msra.mxu0 0
        %970 = vmatpush.bf16.msra.mxu0 %v961
        %971 = vmatmul.bf16.gmra.mxu0 %v957
        %v972 = vpop.f32.mrf.mxu0
        %v973 = vadd.f32 0.0, %v972
        %v974 = vpop.f32.mrf.mxu0
        %975 = vdwg.mxu0
        %976 = vrot.lane.b32.xlu0 %v684, 64
        %v977 = vpop.permute.xlu0 %976
        %v979 = vsel %vm662, %v947, 0
        %v982 = vsel %vm959, %v977, 0
        %984 = vmatpush.bf16.msra.mxu0 0
        %985 = vmatpush.bf16.msra.mxu0 0
        %986 = vmatpush.bf16.msra.mxu0 0
        %987 = vmatpush.bf16.msra.mxu0 0
        %988 = vmatpush.bf16.msra.mxu0 0
        %989 = vmatpush.bf16.msra.mxu0 0
        %990 = vmatpush.bf16.msra.mxu0 0
        %991 = vmatpush.bf16.msra.mxu0 %v982
        %992 = vmatmul.bf16.gmra.mxu0 %v979
        %v993 = vpop.f32.mrf.mxu0
        %v994 = vadd.f32 0.0, %v993
        %v995 = vpop.f32.mrf.mxu0
        %996 = vdwg.mxu0
        %997 = vrot.lane.b32.xlu0 %v708, 64
        %v998 = vpop.permute.xlu0 %997
        %v1000 = vsel %vm662, %v948, 0
        %v1003 = vsel %vm959, %v998, 0
        %1005 = vmatpush.bf16.msra.mxu0 0
        %1006 = vmatpush.bf16.msra.mxu0 0
        %1007 = vmatpush.bf16.msra.mxu0 0
        %1008 = vmatpush.bf16.msra.mxu0 0
        %1009 = vmatpush.bf16.msra.mxu0 0
        %1010 = vmatpush.bf16.msra.mxu0 0
        %1011 = vmatpush.bf16.msra.mxu0 0
        %1012 = vmatpush.bf16.msra.mxu0 %v1003
        %1013 = vmatmul.bf16.gmra.mxu0 %v1000
        %v1014 = vpop.f32.mrf.mxu0
        %v1015 = vadd.f32 0.0, %v1014
        %v1016 = vpop.f32.mrf.mxu0
        %1017 = vdwg.mxu0
        %1018 = vrot.lane.b32.xlu0 %v732, 64
        %v1019 = vpop.permute.xlu0 %1018
        %v1021 = vsel %vm662, %v949, 0
        %v1024 = vsel %vm959, %v1019, 0
        %1026 = vmatpush.bf16.msra.mxu0 0
        %1027 = vmatpush.bf16.msra.mxu0 0
        %1028 = vmatpush.bf16.msra.mxu0 0
        %1029 = vmatpush.bf16.msra.mxu0 0
        %1030 = vmatpush.bf16.msra.mxu0 0
        %1031 = vmatpush.bf16.msra.mxu0 0
        %1032 = vmatpush.bf16.msra.mxu0 0
        %1033 = vmatpush.bf16.msra.mxu0 %v1024
        %1034 = vmatmul.bf16.gmra.mxu0 %v1021
        %v1035 = vpop.f32.mrf.mxu0
        %v1036 = vadd.f32 0.0, %v1035
        %v1037 = vpop.f32.mrf.mxu0
        %1038 = vdwg.mxu0
        %1039 = vrot.lane.b32.xlu0 %v756, 64
        %v1040 = vpop.permute.xlu0 %1039
        %v1042 = vsel %vm662, %v950, 0
        %v1045 = vsel %vm959, %v1040, 0
        %1047 = vmatpush.bf16.msra.mxu0 0
        %1048 = vmatpush.bf16.msra.mxu0 0
        %1049 = vmatpush.bf16.msra.mxu0 0
        %1050 = vmatpush.bf16.msra.mxu0 0
        %1051 = vmatpush.bf16.msra.mxu0 0
        %1052 = vmatpush.bf16.msra.mxu0 0
        %1053 = vmatpush.bf16.msra.mxu0 0
        %1054 = vmatpush.bf16.msra.mxu0 %v1045
        %1055 = vmatmul.bf16.gmra.mxu0 %v1042
        %v1056 = vpop.f32.mrf.mxu0
        %v1057 = vadd.f32 0.0, %v1056
        %v1058 = vpop.f32.mrf.mxu0
        %1059 = vdwg.mxu0
        %1060 = vrot.lane.b32.xlu0 %v780, 64
        %v1061 = vpop.permute.xlu0 %1060
        %v1063 = vsel %vm662, %v951, 0
        %v1066 = vsel %vm959, %v1061, 0
        %1068 = vmatpush.bf16.msra.mxu0 0
        %1069 = vmatpush.bf16.msra.mxu0 0
        %1070 = vmatpush.bf16.msra.mxu0 0
        %1071 = vmatpush.bf16.msra.mxu0 0
        %1072 = vmatpush.bf16.msra.mxu0 0
        %1073 = vmatpush.bf16.msra.mxu0 0
        %1074 = vmatpush.bf16.msra.mxu0 0
        %1075 = vmatpush.bf16.msra.mxu0 %v1066
        %1076 = vmatmul.bf16.gmra.mxu0 %v1063
        %v1077 = vpop.f32.mrf.mxu0
        %v1078 = vadd.f32 0.0, %v1077
        %v1079 = vpop.f32.mrf.mxu0
        %1080 = vdwg.mxu0
        %1081 = vrot.lane.b32.xlu0 %v804, 64
        %v1082 = vpop.permute.xlu0 %1081
        %v1084 = vsel %vm662, %v952, 0
        %v1087 = vsel %vm959, %v1082, 0
        %1089 = vmatpush.bf16.msra.mxu0 0
        %1090 = vmatpush.bf16.msra.mxu0 0
        %1091 = vmatpush.bf16.msra.mxu0 0
        %1092 = vmatpush.bf16.msra.mxu0 0
        %1093 = vmatpush.bf16.msra.mxu0 0
        %1094 = vmatpush.bf16.msra.mxu0 0
        %1095 = vmatpush.bf16.msra.mxu0 0
        %1096 = vmatpush.bf16.msra.mxu0 %v1087
        %1097 = vmatmul.bf16.gmra.mxu0 %v1084
        %v1098 = vpop.f32.mrf.mxu0
        %v1099 = vadd.f32 0.0, %v1098
        %v1100 = vpop.f32.mrf.mxu0
        %1101 = vdwg.mxu0
        %1102 = vrot.lane.b32.xlu0 %v828, 64
        %v1103 = vpop.permute.xlu0 %1102
        %v1105 = vsel %vm662, %v953, 0
        %v1108 = vsel %vm959, %v1103, 0
        %1110 = vmatpush.bf16.msra.mxu0 0
        %1111 = vmatpush.bf16.msra.mxu0 0
        %1112 = vmatpush.bf16.msra.mxu0 0
        %1113 = vmatpush.bf16.msra.mxu0 0
        %1114 = vmatpush.bf16.msra.mxu0 0
        %1115 = vmatpush.bf16.msra.mxu0 0
        %1116 = vmatpush.bf16.msra.mxu0 0
        %1117 = vmatpush.bf16.msra.mxu0 %v1108
        %1118 = vmatmul.bf16.gmra.mxu0 %v1105
        %v1119 = vpop.f32.mrf.mxu0
        %v1120 = vadd.f32 0.0, %v1119
        %v1121 = vpop.f32.mrf.mxu0
        %1122 = vdwg.mxu0
        %1125 = vrot.lane.b32.xlu0 %v1015, 8
        %v1126 = vpop.permute.xlu0 %1125
        %1127 = vrot.lane.b32.xlu0 %v1036, 8
        %v1128 = vpop.permute.xlu0 %1127
        %1133 = vrot.lane.b32.xlu0 %v1057, 16
        %v1134 = vpop.permute.xlu0 %1133
        %1135 = vrot.lane.b32.xlu0 %v1078, 16
        %v1136 = vpop.permute.xlu0 %1135
        %1141 = vrot.lane.b32.xlu0 %v1099, 24
        %v1142 = vpop.permute.xlu0 %1141
        %1143 = vrot.lane.b32.xlu0 %v1120, 24
        %v1144 = vpop.permute.xlu0 %1143
        %v1147 = vsel %vm662, %v973, %v1126
        %v1148 = vsel %vm662, %v994, %v1128
        %vm1149 = vcmask 130048
        %v1150 = vsel %vm1149, %v1147, %v1134
        %v1151 = vsel %vm1149, %v1148, %v1136
        %vm1152 = vcmask 195584
        %v1153 = vsel %vm1152, %v1150, %v1142
        %v1154 = vsel %vm1152, %v1151, %v1144
        %v1155 = vld [vmem:[%s516] sm:$0x3f]
        %v1156 = vpack.c.bf16 %v1154, %v1153
        %v1157 = vld [vmem:[%s499] sm:$0xf]
        %v1158 = vld [vmem:[%s499 + $0x4] sm:$0xf]
        %v1159 = vld [vmem:[%s499 + $0x8] sm:$0xf]
        %v1160 = vld [vmem:[%s499 + $0xc] sm:$0xf]
        %v1161 = vperm.slane %v1155, 0
        %v1166 = vunpack.c.l.b16 %v1157
        %v1167 = vunpack.c.l.b16 %v1158
        %v1168 = vunpack.c.l.b16 %v1159
        %v1169 = vunpack.c.l.b16 %v1160
        %v1170 = vpack.c.b16 %v1167, %v1166
        %v1171 = vpack.c.b16 %v1169, %v1168
        %v1175 = vsel %vm611, %v1156, 0
        %1177 = vmatpush.bf16.msra.mxu0 0
        %1178 = vmatpush.bf16.msra.mxu0 0
        %1179 = vmatpush.bf16.msra.mxu0 0
        %1180 = vmatpush.bf16.msra.mxu0 0
        %1181 = vmatpush.bf16.msra.mxu0 0
        %1182 = vmatpush.bf16.msra.mxu0 0
        %1183 = vmatpush.bf16.msra.mxu0 %v1171
        %1184 = vmatpush.bf16.msra.mxu0 %v1170
        %1185 = vmatmul.bf16.gmra.mxu0 %v1175
        %v1186 = vpop.f32.mrf.mxu0
        %v1187 = vadd.f32 %v1161, %v1186
        %v1188 = vpop.f32.mrf.mxu0
        %v1189 = vadd.f32 %v1161, %v1188
        %1190 = vdwg.mxu0
        %v1191 = vadd.f32 %v588, %v1187
        %v1192 = vadd.f32 %v589, %v1189
        %v1193 = vsel %vm611, %v1191, 0.0
        %1194 = vadd.xlane.f32.xlu0 %v1193
        %v1195 = vpop.xlane.xlu0 %1194
        %v1196 = vsel %vm611, %v1192, 0.0
        %1197 = vadd.xlane.f32.xlu0 %v1196
        %v1198 = vpop.xlane.xlu0 %1197
        %v1199 = vrcp.pop 32.0
        %v1200 = vmul.f32 32.0, %v1199
        %v1201 = vsub.f32 1.0, %v1200
        %v1202 = vmul.f32 %v1199, %v1201
        %v1203 = vadd.f32 %v1199, %v1202
        %vm1204 = vweird.f32 %v1199
        %v1205 = vsel %vm1204, %v1199, %v1203
        %v1206 = vmul.f32 %v1195, %v1205
        %v1207 = vmul.f32 %v1198, %v1205
        %v1208 = vmul.f32 %v1191, %v1191
        %v1209 = vmul.f32 %v1192, %v1192
        %v1210 = vsel %vm611, %v1208, 0.0
        %1211 = vadd.xlane.f32.xlu0 %v1210
        %v1212 = vpop.xlane.xlu0 %1211
        %v1213 = vsel %vm611, %v1209, 0.0
        %1214 = vadd.xlane.f32.xlu0 %v1213
        %v1215 = vpop.xlane.xlu0 %1214
        %v1216 = vmul.f32 %v1212, %v1205
        %v1217 = vmul.f32 %v1215, %v1205
        %v1218 = vmul.f32 %v1206, %v1206
        %v1219 = vmul.f32 %v1207, %v1207
        %v1220 = vsub.f32 %v1216, %v1218
        %v1221 = vsub.f32 %v1217, %v1219
        %v1222 = vmax.f32 %v1220, 0.0
        %v1223 = vmax.f32 %v1221, 0.0
        %v1224 = vsub.f32 %v1191, %v1206
        %v1225 = vsub.f32 %v1192, %v1207
        %v1226 = vadd.f32 %v1222, 1e-05
        %v1227 = vadd.f32 %v1223, 1e-05
        %v1228 = vrsqrt.pop %v1226
        %v1229 = vmul.f32 %v1228, %v1226
        %v1230 = vmul.f32 %v1229, %v1228
        %v1231 = vmul.f32 0.5, %v1230
        %v1232 = vsub.f32 1.5, %v1231
        %v1233 = vmul.f32 %v1228, %v1232
        %vm1234 = vweird.f32 %v1226
        %vm1235 = vweird.f32 %v1228
        %vm1236 = vmor %vm1234, %vm1235
        %v1237 = vsel %vm1236, %v1228, %v1233
        %v1238 = vrsqrt.pop %v1227
        %v1239 = vmul.f32 %v1238, %v1227
        %v1240 = vmul.f32 %v1239, %v1238
        %v1241 = vmul.f32 0.5, %v1240
        %v1242 = vsub.f32 1.5, %v1241
        %v1243 = vmul.f32 %v1238, %v1242
        %vm1244 = vweird.f32 %v1227
        %vm1245 = vweird.f32 %v1238
        %vm1246 = vmor %vm1244, %vm1245
        %v1247 = vsel %vm1246, %v1238, %v1243
        %v1248 = vmul.f32 %v1224, %v1237
        %v1249 = vmul.f32 %v1225, %v1247
        %v1250 = vperm.slane %v1155, 2
        %v1251 = vmul.f32 %v1248, %v1250
        %v1252 = vmul.f32 %v1249, %v1250
        %v1253 = vperm.slane %v1155, 3
        %v1254 = vadd.f32 %v1251, %v1253
        %v1255 = vadd.f32 %v1252, %v1253
        %v1256 = vpack.c.bf16 %v1255, %v1254
        %v1257 = vld [vmem:[%s504] sm:$0xf]
        %v1258 = vld [vmem:[%s504 + $0x4] sm:$0xf]
        %v1259 = vld [vmem:[%s504 + $0x8] sm:$0xf]
        %v1260 = vld [vmem:[%s504 + $0xc] sm:$0xf]
        %v1261 = vld [vmem:[%s507] sm:$0x1]
        %v1263 = vperm.slane %v1261, 0
        %v1269 = vunpack.c.l.b16 %v1257
        %v1270 = vunpack.c.l.b16 %v1258
        %v1271 = vunpack.c.l.b16 %v1259
        %v1272 = vunpack.c.l.b16 %v1260
        %v1273 = vpack.c.b16 %v1270, %v1269
        %v1274 = vpack.c.b16 %v1272, %v1271
        %v1278 = vsel %vm611, %v1256, 0
        %1280 = vmatpush.bf16.msra.mxu0 0
        %1281 = vmatpush.bf16.msra.mxu0 0
        %1282 = vmatpush.bf16.msra.mxu0 0
        %1283 = vmatpush.bf16.msra.mxu0 0
        %1284 = vmatpush.bf16.msra.mxu0 0
        %1285 = vmatpush.bf16.msra.mxu0 0
        %1286 = vmatpush.bf16.msra.mxu0 %v1274
        %1287 = vmatpush.bf16.msra.mxu0 %v1273
        %1288 = vmatmul.bf16.gmra.mxu0 %v1278
        %v1289 = vpop.f32.mrf.mxu0
        %v1290 = vadd.f32 %v1263, %v1289
        %v1291 = vpop.f32.mrf.mxu0
        %v1292 = vadd.f32 %v1263, %v1291
        %1293 = vdwg.mxu0
        %v1294 = vmax.f32 %v1290, 0.0
        %v1295 = vmax.f32 %v1292, 0.0
        %v1296 = vpack.c.bf16 %v1295, %v1294
        %v1297 = vld [vmem:[%s512] sm:$0xf]
        %v1298 = vld [vmem:[%s512 + $0x4] sm:$0xf]
        %v1299 = vld [vmem:[%s512 + $0x8] sm:$0xf]
        %v1300 = vld [vmem:[%s512 + $0xc] sm:$0xf]
        %v1301 = vld [vmem:[%s512 + $0x10] sm:$0xf]
        %v1302 = vld [vmem:[%s512 + $0x14] sm:$0xf]
        %v1303 = vld [vmem:[%s512 + $0x18] sm:$0xf]
        %v1304 = vld [vmem:[%s512 + $0x1c] sm:$0xf]
        %v1305 = vperm.slane %v1155, 1
        %v1314 = vunpack.c.l.b16 %v1297
        %v1315 = vunpack.c.l.b16 %v1298
        %v1316 = vunpack.c.l.b16 %v1299
        %v1317 = vunpack.c.l.b16 %v1300
        %v1318 = vunpack.c.l.b16 %v1301
        %v1319 = vunpack.c.l.b16 %v1302
        %v1320 = vunpack.c.l.b16 %v1303
        %v1321 = vunpack.c.l.b16 %v1304
        %v1322 = vpack.c.b16 %v1315, %v1314
        %v1323 = vpack.c.b16 %v1317, %v1316
        %v1324 = vpack.c.b16 %v1319, %v1318
        %v1325 = vpack.c.b16 %v1321, %v1320
        %vm1330 = vcmask 523264
        %v1332 = vsel %vm1330, %v1296, 0
        %1334 = vmatpush.bf16.msra.mxu0 0
        %1335 = vmatpush.bf16.msra.mxu0 0
        %1336 = vmatpush.bf16.msra.mxu0 0
        %1337 = vmatpush.bf16.msra.mxu0 0
        %1338 = vmatpush.bf16.msra.mxu0 %v1325
        %1339 = vmatpush.bf16.msra.mxu0 %v1324
        %1340 = vmatpush.bf16.msra.mxu0 %v1323
        %1341 = vmatpush.bf16.msra.mxu0 %v1322
        %1342 = vmatmul.bf16.gmra.mxu0 %v1332
        %v1343 = vpop.f32.mrf.mxu0
        %v1344 = vadd.f32 %v1305, %v1343
        %v1345 = vpop.f32.mrf.mxu0
        %v1346 = vadd.f32 %v1305, %v1345
        %1347 = vdwg.mxu0
        %v1348 = vadd.f32 %v1254, %v1344
        %v1349 = vadd.f32 %v1255, %v1346
        %v1350 = vsel %vm611, %v1348, 0.0
        %1351 = vadd.xlane.f32.xlu0 %v1350
        %v1352 = vpop.xlane.xlu0 %1351
        %v1353 = vsel %vm611, %v1349, 0.0
        %1354 = vadd.xlane.f32.xlu0 %v1353
        %v1355 = vpop.xlane.xlu0 %1354
        %v1356 = vmul.f32 %v1352, %v1205
        %v1357 = vmul.f32 %v1355, %v1205
        %v1358 = vmul.f32 %v1348, %v1348
        %v1359 = vmul.f32 %v1349, %v1349
        %v1360 = vsel %vm611, %v1358, 0.0
        %1361 = vadd.xlane.f32.xlu0 %v1360
        %v1362 = vpop.xlane.xlu0 %1361
        %v1363 = vsel %vm611, %v1359, 0.0
        %1364 = vadd.xlane.f32.xlu0 %v1363
        %v1365 = vpop.xlane.xlu0 %1364
        %v1366 = vmul.f32 %v1362, %v1205
        %v1367 = vmul.f32 %v1365, %v1205
        %v1368 = vmul.f32 %v1356, %v1356
        %v1369 = vmul.f32 %v1357, %v1357
        %v1370 = vsub.f32 %v1366, %v1368
        %v1371 = vsub.f32 %v1367, %v1369
        %v1372 = vmax.f32 %v1370, 0.0
        %v1373 = vmax.f32 %v1371, 0.0
        %v1374 = vsub.f32 %v1348, %v1356
        %v1375 = vsub.f32 %v1349, %v1357
        %v1376 = vadd.f32 %v1372, 1e-05
        %v1377 = vadd.f32 %v1373, 1e-05
        %v1378 = vrsqrt.pop %v1376
        %v1379 = vmul.f32 %v1378, %v1376
        %v1380 = vmul.f32 %v1379, %v1378
        %v1381 = vmul.f32 0.5, %v1380
        %v1382 = vsub.f32 1.5, %v1381
        %v1383 = vmul.f32 %v1378, %v1382
        %vm1384 = vweird.f32 %v1376
        %vm1385 = vweird.f32 %v1378
        %vm1386 = vmor %vm1384, %vm1385
        %v1387 = vsel %vm1386, %v1378, %v1383
        %v1388 = vrsqrt.pop %v1377
        %v1389 = vmul.f32 %v1388, %v1377
        %v1390 = vmul.f32 %v1389, %v1388
        %v1391 = vmul.f32 0.5, %v1390
        %v1392 = vsub.f32 1.5, %v1391
        %v1393 = vmul.f32 %v1388, %v1392
        %vm1394 = vweird.f32 %v1377
        %vm1395 = vweird.f32 %v1388
        %vm1396 = vmor %vm1394, %vm1395
        %v1397 = vsel %vm1396, %v1388, %v1393
        %v1398 = vmul.f32 %v1374, %v1387
        %v1399 = vmul.f32 %v1375, %v1397
        %v1400 = vperm.slane %v1155, 4
        %v1401 = vmul.f32 %v1398, %v1400
        %v1402 = vmul.f32 %v1399, %v1400
        %v1403 = vperm.slane %v1155, 5
        %v1404 = vadd.f32 %v1401, %v1403
        %v1405 = vadd.f32 %v1402, %v1403
        %1406 = vst.msk [vmem:[#allocation2] sm:$0xff] %vm611, %v1404
        %1407 = vst.msk [vmem:[#allocation2 + $0x8] sm:$0xff] %vm611, %v1405
        // Predicated region
        $region69: #{tpu_custom_call.1} parent=63 // pred_check
          %p1408 = pneg %p324
        $region70: #{tpu_custom_call.1} parent=63 // pred_check_branch
          %1410 = sbr.rel (%p1408) target = $region72
        $region71: #{tpu_custom_call.1} parent=63 // pred_region
          %s1411 = smul.u32 2, %s27
          %1413 = vsyncadd [#allocation3], 0
          %s1414 = smul.addr %s1411, 8
          %s1415 = scalar_lea.hbm %s11, %s1414
          %s1416 = sshll.u32 [#allocation2], 4
          %s1417 = int_to_ptr.vmem [resolvable:$true] %s1416
          %s1418 = sshll.u32 %s1415, 4
          %s1419 = int_to_ptr.hbm [resolvable:$true] %s1418
          %1424 = dma.vmem_to_hbm [thread:$0]  %s1417, 256, %s1419, [#allocation3], 128, 128, 8
        $region72: #{tpu_custom_call.1} parent=63 // pred_fallthru
          _
        // Predicated region
        $region73: #{tpu_custom_call.1} parent=63 // pred_check
          %p1425 = pneg %p324
        $region74: #{tpu_custom_call.1} parent=63 // pred_check_branch
          %1427 = sbr.rel (%p1425) target = $region76
        $region75: #{tpu_custom_call.1} parent=63 // pred_region
          %1429 = dma.done [#allocation3], 256
        $region76: #{tpu_custom_call.1} parent=63 // pred_fallthru
          _
      $region64: #{tpu_custom_call.1} parent=5 // pred_fallthru
        _
      %p1430 = scmp.le.s32.totalorder 2, %s18
      // Predicated region
      $region77: #{tpu_custom_call.1} parent=5 // pred_check
        %p1431 = pneg %p1430
      $region78: #{tpu_custom_call.1} parent=5 // pred_check_branch
        %1433 = sbr.rel (%p1431) target = $region80
      $region79: #{tpu_custom_call.1} parent=5 // pred_region
        %s1434 = ssub.s32 %s18, 2
      $region80: #{tpu_custom_call.1} parent=5 // pred_fallthru
        _
    $region6: #{tpu_custom_call.1} parent=1 // loop_footer
      %s22 = sadd.s32 1, %s18
    $region7: #{tpu_custom_call.1} parent=1 // loop_footer_branch
      %17 = sbr.rel target = $region3
    $region8: #{tpu_custom_call.1} parent=1 // loop_exit
      _
    %1435 = vsyncpa [#allocation3], 1
    %s1436 = scalar_lea.sflag [#allocation3], 1
    %1437 = vsyncpa %s1436, 1

</llo_original>
